<compile_context>
chip_gen: v7x
topology: tpu7x:2x2x1
jax: 0.10.0
libtpu: 0.0.40
codegen_flags: <defaults>
</compile_context>

<pallas_src>
import math
from functools import partial

import jax
import jax.numpy as jnp
from jax import lax
from jax.experimental import pallas as pl
from jax.experimental.pallas import tpu as pltpu


def _pick_vmem_limit():
    """~96 MiB on v5e/v6e (128 MiB VMEM), ~48 MiB on v7x (64 MiB per-TC VMEM)."""
    try:
        cap = int(pltpu.get_tpu_info().vmem_capacity_bytes)
    except Exception:
        cap = 64 * 1024 * 1024
    return max(32 * 1024 * 1024, min(100 * 1024 * 1024, (cap * 3) // 4))


_VMEM_LIMIT = _pick_vmem_limit()
_FF_CHUNK = 512          # d_ff chunk width: bounds the (tm, d_ff) FFN intermediate


def _row_tile(m, target=512):
    """Largest row tile <= target that divides m and is a multiple of 8 (else full m)."""
    if m % target == 0:
        return target
    for t in range(min(target, m), 0, -8):
        if t % 8 == 0 and m % t == 0:
            return t
    return m


def _const_spec(a):
    """Whole-array parameter block whose index never changes -> single-buffered."""
    idx = lambda i: (0,) * a.ndim
    try:
        return pl.BlockSpec(a.shape, idx, pipeline_mode=pl.Buffered(1))
    except TypeError:                      # older pallas without pipeline_mode kwarg
        return pl.BlockSpec(a.shape, idx)


# --------------------- fused LayerNorm + (single) QKV projection kernel --------------------
def ln_qkv_kernel(x_ref, g_ref, b_ref, wqkv_ref, bqkv_ref, q_ref, k_ref, v_ref, *, eps):
    x = x_ref[...].astype(jnp.float32)                       # (tm, D); LN stats in f32 (v5e-safe)
    d = x.shape[-1]
    mean = jnp.mean(x, axis=-1, keepdims=True)
    diff = x - mean
    std = jnp.sqrt(jnp.sum(diff * diff, axis=-1, keepdims=True) / (d - 1))   # torch.std (unbiased)
    xn = (g_ref[...].astype(jnp.float32) * diff / (std + eps)
          + b_ref[...].astype(jnp.float32)).astype(wqkv_ref.dtype)
    # one (tm,D)@(D,3D) MXU matmul (better weight residency, one bias add) instead of three
    qkv = (jnp.dot(xn, wqkv_ref[...], preferred_element_type=jnp.float32)
           + bqkv_ref[...].astype(jnp.float32))
    q_ref[...] = qkv[:, :d].astype(q_ref.dtype)
    k_ref[...] = qkv[:, d:2 * d].astype(k_ref.dtype)
    v_ref[...] = qkv[:, 2 * d:].astype(v_ref.dtype)


def ln_qkv_proj(x2d, g, b, wqkv, bqkv, eps=1e-6):
    M, D = x2d.shape
    tm = _row_tile(M)
    row = pl.BlockSpec((tm, D), lambda i: (i, 0))
    return pl.pallas_call(
        partial(ln_qkv_kernel, eps=eps),
        out_shape=(jax.ShapeDtypeStruct((M, D), x2d.dtype),
                   jax.ShapeDtypeStruct((M, D), x2d.dtype),
                   jax.ShapeDtypeStruct((M, D), x2d.dtype)),
        grid=(M // tm,),
        in_specs=[row, _const_spec(g), _const_spec(b), _const_spec(wqkv), _const_spec(bqkv)],
        out_specs=(row, row, row),
        compiler_params=pltpu.CompilerParams(
            dimension_semantics=("parallel",), vmem_limit_bytes=_VMEM_LIMIT),
    )(x2d, g, b, wqkv, bqkv)


# ------------- fused attention (all heads) + output projection + residual -----------
def attn_out_kernel(q_ref, k_ref, v_ref, m_ref, x_ref, wo_ref, bo_ref,
                    y_ref, attn_ref, ctx_ref, *, h, scale):
    S, D = q_ref.shape[1], q_ref.shape[2]
    dk = D // h
    q = q_ref[0].astype(jnp.float32)                          # (S, D)
    k = k_ref[0].astype(jnp.float32)
    v = v_ref[0].astype(jnp.float32)
    # mask select hoisted OUT of the head loop: one additive bias reused by every head
    bias = jnp.where(m_ref[0] == 0, -1e9, 0.0).astype(jnp.float32)   # (1,S) -> bcast over queries

    for hh in range(h):                                       # static unroll, static lane slices
        lo = hh * dk
        qh = q[:, lo:lo + dk]
        kh = k[:, lo:lo + dk]
        vh = v[:, lo:lo + dk]
        s = lax.dot_general(qh, kh, (((1,), (1,)), ((), ())),
                            preferred_element_type=jnp.float32) * scale + bias   # (S, S)
        mx = jnp.max(s, axis=-1, keepdims=True)
        p = jnp.exp(s - mx)
        a = p * pl.reciprocal(jnp.sum(p, axis=-1, keepdims=True), approx=True)
        attn_ref[0, hh] = a.astype(attn_ref.dtype)
        # per-head context goes into the (S, D) VMEM scratch -> one big W_o matmul below
        ctx_ref[:, lo:lo + dk] = jnp.dot(a, vh, preferred_element_type=jnp.float32)

    # ONE full-D-contraction W_o matmul (MXU-native) instead of h dk-contraction matmuls,
    # fused with the residual add and output-projection bias.
    ctx = ctx_ref[...]
    out = jnp.dot(ctx.astype(wo_ref.dtype), wo_ref[...], preferred_element_type=jnp.float32)
    y_ref[0] = (x_ref[0].astype(jnp.float32) + out
                + bo_ref[...].astype(jnp.float32)).astype(y_ref.dtype)
    # TODO(synk): for long S, move h (and KV blocks with online softmax) into the grid to bound
    # the (1,h,S,S) attention-weights block and (S,S) score temporaries on v7x (64 MiB VMEM).


def fused_attention(q, k, v, mask, x, wo, bo, h):
    B, S, D = q.shape
    dk = D // h
    row3 = pl.BlockSpec((1, S, D), lambda b: (b, 0, 0))
    return pl.pallas_call(
        partial(attn_out_kernel, h=h, scale=1.0 / math.sqrt(dk)),
        out_shape=(jax.ShapeDtypeStruct((B, S, D), x.dtype),
                   jax.ShapeDtypeStruct((B, h, S, S), x.dtype)),
        grid=(B,),
        in_specs=[row3, row3, row3,
                  pl.BlockSpec((1, 1, S), lambda b: (b, 0, 0)),
                  row3, _const_spec(wo), _const_spec(bo)],
        out_specs=(row3, pl.BlockSpec((1, h, S, S), lambda b: (b, 0, 0, 0))),
        scratch_shapes=[pltpu.VMEM((S, D), jnp.float32)],
        compiler_params=pltpu.CompilerParams(
            dimension_semantics=("parallel",), vmem_limit_bytes=_VMEM_LIMIT),
    )(q, k, v, mask, x, wo, bo)


# ---------------- fused FFN kernel: LayerNorm + W1 + ReLU + W2 (d_ff chunked) --------------
def ln_ffn_kernel(x_ref, g_ref, b_ref, w1_ref, b1_ref, w2_ref, b2_ref, o_ref, *, eps, ff_chunk):
    x = x_ref[...].astype(jnp.float32)
    rows, d = x.shape
    d_ff = w1_ref.shape[-1]
    mean = jnp.mean(x, axis=-1, keepdims=True)
    diff = x - mean
    std = jnp.sqrt(jnp.sum(diff * diff, axis=-1, keepdims=True) / (d - 1))
    xn = (g_ref[...].astype(jnp.float32) * diff / (std + eps)
          + b_ref[...].astype(jnp.float32)).astype(w1_ref.dtype)
    # d_ff is chunked: only a (rows, ff_chunk) intermediate is ever live; W2 partials accumulate
    # in f32.  The full (rows, d_ff) intermediate never exists, and never touches HBM.
    acc = jnp.zeros((rows, d), jnp.float32) + b2_ref[...].astype(jnp.float32)
    for c0 in range(0, d_ff, ff_chunk):
        c1 = min(c0 + ff_chunk, d_ff)
        hdd = jnp.maximum(
            jnp.dot(xn, w1_ref[:, c0:c1], preferred_element_type=jnp.float32)
            + b1_ref[:, c0:c1].astype(jnp.float32), 0.0).astype(w2_ref.dtype)
        acc = acc + jnp.dot(hdd, w2_ref[c0:c1, :], preferred_element_type=jnp.float32)
    o_ref[...] = acc.astype(o_ref.dtype)


def ln_ffn(x0, g, b, w1, b1, w2, b2, eps=1e-6, ff_chunk=_FF_CHUNK):
    S, D = x0.shape
    ts = _row_tile(S)
    row = pl.BlockSpec((ts, D), lambda i: (i, 0))
    return pl.pallas_call(
        partial(ln_ffn_kernel, eps=eps, ff_chunk=ff_chunk),
        out_shape=jax.ShapeDtypeStruct((S, D), x0.dtype),
        grid=(S // ts,),
        in_specs=[row, _const_spec(g), _const_spec(b),
                  _const_spec(w1), _const_spec(b1), _const_spec(w2), _const_spec(b2)],
        out_specs=row,
        compiler_params=pltpu.CompilerParams(
            dimension_semantics=("parallel",), vmem_limit_bytes=_VMEM_LIMIT),
    )(x0, g, b, w1, b1, w2, b2)


# --------------------- broadcast residual add: out[b] = y[b] + ff0 (aliased onto y) ---------
def residual_bcast_kernel(y_ref, f_ref, o_ref):
    o_ref[0] = y_ref[0] + f_ref[...]


def residual_broadcast_add(y, ff0):
    B, S, D = y.shape
    blk = pl.BlockSpec((1, S, D), lambda b: (b, 0, 0))        # lane/sublane-dense, one DMA per batch
    return pl.pallas_call(
        residual_bcast_kernel,
        out_shape=jax.ShapeDtypeStruct((B, S, D), y.dtype),
        grid=(B,),
        in_specs=[blk, _const_spec(ff0)],
        out_specs=blk,
        input_output_aliases={0: 0},                          # reuse y's HBM buffer for the output
        compiler_params=pltpu.CompilerParams(
            dimension_semantics=("parallel",), vmem_limit_bytes=_VMEM_LIMIT),
    )(y, ff0)


# --------------------------- Parameters & full forward ------------------------------
def init_params(key, D, h, d_ff):
    ks = jax.random.split(key, 12)

    def w(k, shape, scale=0.05):
        return (scale * jax.random.normal(k, shape)).astype(jnp.float32)

    return dict(
        ln0_g=jnp.ones((1, D), jnp.float32), ln0_b=jnp.zeros((1, D), jnp.float32),
        ln1_g=jnp.ones((1, D), jnp.float32), ln1_b=jnp.zeros((1, D), jnp.float32),
        wq=w(ks[0], (D, D)), bq=w(ks[1], (1, D), 0.01),
        wk=w(ks[2], (D, D)), bk=w(ks[3], (1, D), 0.01),
        wv=w(ks[4], (D, D)), bv=w(ks[5], (1, D), 0.01),
        wo=w(ks[6], (D, D)), bo=w(ks[7], (1, D), 0.01),
        w1=w(ks[8], (D, d_ff)), b1=w(ks[9], (1, d_ff), 0.01),
        w2=w(ks[10], (d_ff, D)), b2=w(ks[11], (1, D), 0.01),
    )


def encoder_layer_forward(x, mask, params, *, h):
    B, S, D = x.shape

    # ---- sublayer[0]: x + self_attn(norm0(x), norm0(x), norm0(x), mask)[0]; attn = [1] ----
    wqkv = jnp.concatenate([params['wq'], params['wk'], params['wv']], axis=1)   # (D, 3D)
    bqkv = jnp.concatenate([params['bq'], params['bk'], params['bv']], axis=1)   # (1, 3D)
    q2, k2, v2 = ln_qkv_proj(x.reshape(B * S, D), params['ln0_g'], params['ln0_b'], wqkv, bqkv)
    # (B*S, D) -> (B, S, D) is a free, contiguous reshape (no transpose between pallas_calls).
    q, k, v = (t.reshape(B, S, D) for t in (q2, k2, v2))
    y, attn = fused_attention(q, k, v, mask, x, params['wo'], params['bo'], h)

    # ---- sublayer[1]: literal PyTorch: x + feed_forward(norm1(x))[0] ----
    # feed_forward returns (B,S,D); the [0] picks batch element 0 and broadcasts it.  LayerNorm
    # and the FFN are row-wise, so only batch-0 rows of norm1(y) are ever needed.
    ff0 = ln_ffn(y[0], params['ln1_g'], params['ln1_b'],
                 params['w1'], params['b1'], params['w2'], params['b2'])
    out = residual_broadcast_add(y, ff0)
    return out, attn


# --------------------------- pure-JAX reference (for the self-check) ------------------------
def reference_forward(x, mask, params, h):
    def ln(t, g, b, eps=1e-6):
        mean = t.mean(-1, keepdims=True)
        diff = t - mean
        std = jnp.sqrt((diff * diff).sum(-1, keepdims=True) / (t.shape[-1] - 1))
        return g * diff / (std + eps) + b

    B, S, D = x.shape
    dk = D // h
    xn = ln(x, params['ln0_g'], params['ln0_b'])
    q = xn @ params['wq'] + params['bq']
    k = xn @ params['wk'] + params['bk']
    v = xn @ params['wv'] + params['bv']
    split = lambda t: t.reshape(B, S, h, dk).transpose(0, 2, 1, 3)
    qh, kh, vh = split(q), split(k), split(v)
    scores = jnp.einsum('bhqd,bhkd->bhqk', qh, kh) / math.sqrt(dk)
    scores = jnp.where(mask[:, :, None, :] == 0, -1e9, scores)
    attn = jax.nn.softmax(scores, axis=-1)
    ctx = jnp.einsum('bhqk,bhkd->bhqd', attn, vh).transpose(0, 2, 1, 3).reshape(B, S, D)
    y = x + ctx @ params['wo'] + params['bo']
    yn = ln(y, params['ln1_g'], params['ln1_b'])
    ff = jnp.maximum(yn @ params['w1'] + params['b1'], 0.0) @ params['w2'] + params['b2']
    return y + ff[0], attn


if __name__ == "__main__":
    B, S, D, h, d_ff = 2, 8, 32, 4, 64
    key = jax.random.PRNGKey(0)
    kx, kp = jax.random.split(key)

    x = jax.random.normal(kx, (B, S, D), dtype=jnp.float32)
    mask = jnp.ones((B, 1, S), jnp.float32).at[1, 0, -2:].set(0.0)   # mask last 2 keys of batch 1
    params = init_params(kp, D, h, d_ff)

    fwd = jax.jit(partial(encoder_layer_forward, h=h))
    out, attn = fwd(x, mask, params)
    jax.block_until_ready((out, attn))

    assert out.shape == (B, S, D), out.shape
    assert attn.shape == (B, h, S, S), attn.shape
    assert bool(jnp.all(jnp.isfinite(out))) and bool(jnp.all(jnp.isfinite(attn)))
    # attention rows must sum to ~1 (approx reciprocal in softmax denom -> loose tolerance)
    assert bool(jnp.all(jnp.abs(jnp.sum(attn, axis=-1) - 1.0) < 1e-2))

    ref_out, ref_attn = reference_forward(x, mask, params, h)
    assert bool(jnp.allclose(attn, ref_attn, atol=1e-2, rtol=1e-2))
    assert bool(jnp.allclose(out, ref_out, atol=2e-2, rtol=2e-2))
    print("KERNEL_OK")
</pallas_src>

<mosaic_0001>
module attributes {stable_mosaic.version = 11 : i64} {
  func.func @ln_qkv_kernel(%arg0: i32, %arg1: memref<16x32xf32, #tpu.memory_space<vmem>>, %arg2: memref<1x32xf32, #tpu.memory_space<vmem>>, %arg3: memref<1x32xf32, #tpu.memory_space<vmem>>, %arg4: memref<32x96xf32, #tpu.memory_space<vmem>>, %arg5: memref<1x96xf32, #tpu.memory_space<vmem>>, %arg6: memref<16x32xf32, #tpu.memory_space<vmem>>, %arg7: memref<16x32xf32, #tpu.memory_space<vmem>>, %arg8: memref<16x32xf32, #tpu.memory_space<vmem>>) attributes {dimension_semantics = [#tpu.dimension_semantics<parallel>], iteration_bounds = array<i64: 1>, scalar_prefetch = 0 : i64, scratch_operands = 0 : i64, tpu.core_type = #tpu.core_type<tc>, window_params = [{transform_indices = @transform_0, window_bounds = array<i64: 16, 32>}, {pipeline_mode = #tpu.pipeline_mode<synchronous>, transform_indices = @transform_1, window_bounds = array<i64: 1, 32>}, {pipeline_mode = #tpu.pipeline_mode<synchronous>, transform_indices = @transform_2, window_bounds = array<i64: 1, 32>}, {pipeline_mode = #tpu.pipeline_mode<synchronous>, transform_indices = @transform_3, window_bounds = array<i64: 32, 96>}, {pipeline_mode = #tpu.pipeline_mode<synchronous>, transform_indices = @transform_4, window_bounds = array<i64: 1, 96>}, {transform_indices = @transform_5, window_bounds = array<i64: 16, 32>}, {transform_indices = @transform_6, window_bounds = array<i64: 16, 32>}, {transform_indices = @transform_7, window_bounds = array<i64: 16, 32>}]} {
    %c0 = arith.constant 0 : index
    %c0_0 = arith.constant 0 : index
    %0 = vector.load %arg1[%c0, %c0_0] : memref<16x32xf32, #tpu.memory_space<vmem>>, vector<16x32xf32>
    %cst = arith.constant dense<0.000000e+00> : vector<16xf32>
    %1 = vector.multi_reduction <add>, %0, %cst [1] : vector<16x32xf32> to vector<16xf32>
    %2 = vector.shape_cast %1 : vector<16xf32> to vector<16x1xf32>
    %cst_1 = arith.constant 3.200000e+01 : f32
    %3 = vector.broadcast %cst_1 : f32 to vector<16x1xf32>
    %4 = arith.divf %2, %3 : vector<16x1xf32>
    %5 = vector.broadcast %4 : vector<16x1xf32> to vector<16x32xf32>
    %6 = arith.subf %0, %5 : vector<16x32xf32>
    %7 = arith.mulf %6, %6 : vector<16x32xf32>
    %cst_2 = arith.constant dense<0.000000e+00> : vector<16xf32>
    %8 = vector.multi_reduction <add>, %7, %cst_2 [1] : vector<16x32xf32> to vector<16xf32>
    %9 = vector.shape_cast %8 : vector<16xf32> to vector<16x1xf32>
    %cst_3 = arith.constant 3.100000e+01 : f32
    %10 = vector.broadcast %cst_3 : f32 to vector<16x1xf32>
    %11 = arith.divf %9, %10 : vector<16x1xf32>
    %12 = math.sqrt %11 : vector<16x1xf32>
    %c0_4 = arith.constant 0 : index
    %c0_5 = arith.constant 0 : index
    %13 = vector.load %arg2[%c0_4, %c0_5] : memref<1x32xf32, #tpu.memory_space<vmem>>, vector<1x32xf32>
    %14 = vector.broadcast %13 : vector<1x32xf32> to vector<16x32xf32>
    %15 = arith.mulf %14, %6 : vector<16x32xf32>
    %cst_6 = arith.constant 9.99999997E-7 : f32
    %16 = vector.broadcast %cst_6 : f32 to vector<16x1xf32>
    %17 = arith.addf %12, %16 : vector<16x1xf32>
    %18 = vector.broadcast %17 : vector<16x1xf32> to vector<16x32xf32>
    %19 = arith.divf %15, %18 : vector<16x32xf32>
    %c0_7 = arith.constant 0 : index
    %c0_8 = arith.constant 0 : index
    %20 = vector.load %arg3[%c0_7, %c0_8] : memref<1x32xf32, #tpu.memory_space<vmem>>, vector<1x32xf32>
    %21 = vector.broadcast %20 : vector<1x32xf32> to vector<16x32xf32>
    %22 = arith.addf %19, %21 : vector<16x32xf32>
    %c0_9 = arith.constant 0 : index
    %c0_10 = arith.constant 0 : index
    %23 = vector.load %arg4[%c0_9, %c0_10] : memref<32x96xf32, #tpu.memory_space<vmem>>, vector<32x96xf32>
    %cst_11 = arith.constant dense<0.000000e+00> : vector<16x96xf32>
    %24 = tpu.matmul %22, %23, %cst_11 {dimension_numbers = #tpu.dot_dimension_numbers<[1], [0], [0], [1], [0, 0, 1, 1], [], []>} : vector<16x32xf32>, vector<32x96xf32>, vector<16x96xf32> -> vector<16x96xf32>
    %c0_12 = arith.constant 0 : index
    %c0_13 = arith.constant 0 : index
    %25 = vector.load %arg5[%c0_12, %c0_13] : memref<1x96xf32, #tpu.memory_space<vmem>>, vector<1x96xf32>
    %26 = vector.broadcast %25 : vector<1x96xf32> to vector<16x96xf32>
    %27 = arith.addf %24, %26 : vector<16x96xf32>
    %28 = vector.extract_strided_slice %27 {offsets = [0, 0], sizes = [16, 32], strides = [1, 1]} : vector<16x96xf32> to vector<16x32xf32>
    %c0_14 = arith.constant 0 : index
    %c0_15 = arith.constant 0 : index
    %29 = vector.load %arg6[%c0_14, %c0_15] : memref<16x32xf32, #tpu.memory_space<vmem>>, vector<16x32xf32>
    tpu.vector_store %arg6[%c0_14, %c0_15], %28 {strides = array<i32>} : memref<16x32xf32, #tpu.memory_space<vmem>>, vector<16x32xf32>,
    %30 = vector.extract_strided_slice %27 {offsets = [0, 32], sizes = [16, 32], strides = [1, 1]} : vector<16x96xf32> to vector<16x32xf32>
    %c0_16 = arith.constant 0 : index
    %c0_17 = arith.constant 0 : index
    %31 = vector.load %arg7[%c0_16, %c0_17] : memref<16x32xf32, #tpu.memory_space<vmem>>, vector<16x32xf32>
    tpu.vector_store %arg7[%c0_16, %c0_17], %30 {strides = array<i32>} : memref<16x32xf32, #tpu.memory_space<vmem>>, vector<16x32xf32>,
    %32 = vector.extract_strided_slice %27 {offsets = [0, 64], sizes = [16, 32], strides = [1, 1]} : vector<16x96xf32> to vector<16x32xf32>
    %c0_18 = arith.constant 0 : index
    %c0_19 = arith.constant 0 : index
    %33 = vector.load %arg8[%c0_18, %c0_19] : memref<16x32xf32, #tpu.memory_space<vmem>>, vector<16x32xf32>
    tpu.vector_store %arg8[%c0_18, %c0_19], %32 {strides = array<i32>} : memref<16x32xf32, #tpu.memory_space<vmem>>, vector<16x32xf32>,
    return
  }
  func.func @transform_0(%arg0: i32) -> (i32, i32) {
    %c0_i32 = arith.constant 0 : i32
    %c0_i32_0 = arith.constant 0 : i32
    return %arg0, %c0_i32 : i32, i32
  }
  func.func @transform_1(%arg0: i32) -> (i32, i32) {
    %c0_i32 = arith.constant 0 : i32
    %c0_i32_0 = arith.constant 0 : i32
    %c0_i32_1 = arith.constant 0 : i32
    return %c0_i32, %c0_i32_0 : i32, i32
  }
  func.func @transform_2(%arg0: i32) -> (i32, i32) {
    %c0_i32 = arith.constant 0 : i32
    %c0_i32_0 = arith.constant 0 : i32
    %c0_i32_1 = arith.constant 0 : i32
    return %c0_i32, %c0_i32_0 : i32, i32
  }
  func.func @transform_3(%arg0: i32) -> (i32, i32) {
    %c0_i32 = arith.constant 0 : i32
    %c0_i32_0 = arith.constant 0 : i32
    %c0_i32_1 = arith.constant 0 : i32
    return %c0_i32, %c0_i32_0 : i32, i32
  }
  func.func @transform_4(%arg0: i32) -> (i32, i32) {
    %c0_i32 = arith.constant 0 : i32
    %c0_i32_0 = arith.constant 0 : i32
    %c0_i32_1 = arith.constant 0 : i32
    return %c0_i32, %c0_i32_0 : i32, i32
  }
  func.func @transform_5(%arg0: i32) -> (i32, i32) {
    %c0_i32 = arith.constant 0 : i32
    %c0_i32_0 = arith.constant 0 : i32
    return %arg0, %c0_i32 : i32, i32
  }
  func.func @transform_6(%arg0: i32) -> (i32, i32) {
    %c0_i32 = arith.constant 0 : i32
    %c0_i32_0 = arith.constant 0 : i32
    return %arg0, %c0_i32 : i32, i32
  }
  func.func @transform_7(%arg0: i32) -> (i32, i32) {
    %c0_i32 = arith.constant 0 : i32
    %c0_i32_0 = arith.constant 0 : i32
    return %arg0, %c0_i32 : i32, i32
  }
}

module attributes {stable_mosaic.version = 11 : i64} {
  func.func @attn_out_kernel(%arg0: i32, %arg1: memref<1x8x32xf32, #tpu.memory_space<vmem>>, %arg2: memref<1x8x32xf32, #tpu.memory_space<vmem>>, %arg3: memref<1x8x32xf32, #tpu.memory_space<vmem>>, %arg4: memref<1x1x8xf32, #tpu.memory_space<vmem>>, %arg5: memref<1x8x32xf32, #tpu.memory_space<vmem>>, %arg6: memref<32x32xf32, #tpu.memory_space<vmem>>, %arg7: memref<1x32xf32, #tpu.memory_space<vmem>>, %arg8: memref<1x8x32xf32, #tpu.memory_space<vmem>>, %arg9: memref<1x4x8x8xf32, #tpu.memory_space<vmem>>, %arg10: memref<8x32xf32, #tpu.memory_space<vmem>>) attributes {dimension_semantics = [#tpu.dimension_semantics<parallel>], iteration_bounds = array<i64: 2>, scalar_prefetch = 0 : i64, scratch_operands = 1 : i64, tpu.core_type = #tpu.core_type<tc>, window_params = [{transform_indices = @transform_0, window_bounds = array<i64: 1, 8, 32>}, {transform_indices = @transform_1, window_bounds = array<i64: 1, 8, 32>}, {transform_indices = @transform_2, window_bounds = array<i64: 1, 8, 32>}, {transform_indices = @transform_3, window_bounds = array<i64: 1, 1, 8>}, {transform_indices = @transform_4, window_bounds = array<i64: 1, 8, 32>}, {pipeline_mode = #tpu.pipeline_mode<synchronous>, transform_indices = @transform_5, window_bounds = array<i64: 32, 32>}, {pipeline_mode = #tpu.pipeline_mode<synchronous>, transform_indices = @transform_6, window_bounds = array<i64: 1, 32>}, {transform_indices = @transform_7, window_bounds = array<i64: 1, 8, 32>}, {transform_indices = @transform_8, window_bounds = array<i64: 1, 4, 8, 8>}]} {
    %c0 = arith.constant 0 : index
    %c0_0 = arith.constant 0 : index
    %c0_1 = arith.constant 0 : index
    %0 = vector.load %arg1[%c0, %c0_0, %c0_1] : memref<1x8x32xf32, #tpu.memory_space<vmem>>, vector<1x8x32xf32>
    %1 = vector.shape_cast %0 : vector<1x8x32xf32> to vector<8x32xf32>
    %c0_2 = arith.constant 0 : index
    %c0_3 = arith.constant 0 : index
    %c0_4 = arith.constant 0 : index
    %2 = vector.load %arg2[%c0_2, %c0_3, %c0_4] : memref<1x8x32xf32, #tpu.memory_space<vmem>>, vector<1x8x32xf32>
    %3 = vector.shape_cast %2 : vector<1x8x32xf32> to vector<8x32xf32>
    %c0_5 = arith.constant 0 : index
    %c0_6 = arith.constant 0 : index
    %c0_7 = arith.constant 0 : index
    %4 = vector.load %arg3[%c0_5, %c0_6, %c0_7] : memref<1x8x32xf32, #tpu.memory_space<vmem>>, vector<1x8x32xf32>
    %5 = vector.shape_cast %4 : vector<1x8x32xf32> to vector<8x32xf32>
    %c0_8 = arith.constant 0 : index
    %c0_9 = arith.constant 0 : index
    %c0_10 = arith.constant 0 : index
    %6 = vector.load %arg4[%c0_8, %c0_9, %c0_10] : memref<1x1x8xf32, #tpu.memory_space<vmem>>, vector<1x1x8xf32>
    %7 = vector.shape_cast %6 : vector<1x1x8xf32> to vector<1x8xf32>
    %cst = arith.constant 0.000000e+00 : f32
    %8 = vector.broadcast %cst : f32 to vector<1x8xf32>
    %9 = arith.cmpf oeq, %7, %8 : vector<1x8xf32>
    %cst_11 = arith.constant -1.000000e+09 : f32
    %cst_12 = arith.constant 0.000000e+00 : f32
    %10 = vector.broadcast %cst_11 : f32 to vector<1x8xf32>
    %11 = vector.broadcast %cst_12 : f32 to vector<1x8xf32>
    %12 = arith.select %9, %10, %11 : vector<1x8xi1>, vector<1x8xf32>
    %13 = vector.extract_strided_slice %1 {offsets = [0, 0], sizes = [8, 8], strides = [1, 1]} : vector<8x32xf32> to vector<8x8xf32>
    %14 = vector.extract_strided_slice %3 {offsets = [0, 0], sizes = [8, 8], strides = [1, 1]} : vector<8x32xf32> to vector<8x8xf32>
    %15 = vector.extract_strided_slice %5 {offsets = [0, 0], sizes = [8, 8], strides = [1, 1]} : vector<8x32xf32> to vector<8x8xf32>
    %cst_13 = arith.constant dense<0.000000e+00> : vector<8x8xf32>
    %16 = tpu.matmul %13, %14, %cst_13 {dimension_numbers = #tpu.dot_dimension_numbers<[1], [1], [0], [0], [0, 0, 1, 0], [], []>} : vector<8x8xf32>, vector<8x8xf32>, vector<8x8xf32> -> vector<8x8xf32>
    %cst_14 = arith.constant 0.353553385 : f32
    %17 = vector.broadcast %cst_14 : f32 to vector<8x8xf32>
    %18 = arith.mulf %16, %17 : vector<8x8xf32>
    %19 = vector.broadcast %12 : vector<1x8xf32> to vector<8x8xf32>
    %20 = arith.addf %18, %19 : vector<8x8xf32>
    %cst_15 = arith.constant dense<0xFF800000> : vector<8xf32>
    %21 = vector.multi_reduction <maximumf>, %20, %cst_15 [1] : vector<8x8xf32> to vector<8xf32>
    %22 = vector.shape_cast %21 : vector<8xf32> to vector<8x1xf32>
    %23 = vector.broadcast %22 : vector<8x1xf32> to vector<8x8xf32>
    %24 = arith.subf %20, %23 : vector<8x8xf32>
    %25 = math.exp %24 : vector<8x8xf32>
    %cst_16 = arith.constant dense<0.000000e+00> : vector<8xf32>
    %26 = vector.multi_reduction <add>, %25, %cst_16 [1] : vector<8x8xf32> to vector<8xf32>
    %27 = vector.shape_cast %26 : vector<8xf32> to vector<8x1xf32>
    %28 = tpu.reciprocal %27 {approx = true} : vector<8x1xf32> -> vector<8x1xf32>
    %29 = vector.broadcast %28 : vector<8x1xf32> to vector<8x8xf32>
    %30 = arith.mulf %25, %29 : vector<8x8xf32>
    %c0_17 = arith.constant 0 : index
    %c0_18 = arith.constant 0 : index
    %c0_19 = arith.constant 0 : index
    %c0_20 = arith.constant 0 : index
    %31 = vector.load %arg9[%c0_17, %c0_18, %c0_19, %c0_20] : memref<1x4x8x8xf32, #tpu.memory_space<vmem>>, vector<1x1x8x8xf32>
    %32 = vector.shape_cast %31 : vector<1x1x8x8xf32> to vector<8x8xf32>
    %33 = vector.shape_cast %30 : vector<8x8xf32> to vector<1x1x8x8xf32>
    tpu.vector_store %arg9[%c0_17, %c0_18, %c0_19, %c0_20], %33 {strides = array<i32>} : memref<1x4x8x8xf32, #tpu.memory_space<vmem>>, vector<1x1x8x8xf32>,
    %cst_21 = arith.constant dense<0.000000e+00> : vector<8x8xf32>
    %34 = tpu.matmul %30, %15, %cst_21 {dimension_numbers = #tpu.dot_dimension_numbers<[1], [0], [0], [1], [0, 0, 1, 1], [], []>} : vector<8x8xf32>, vector<8x8xf32>, vector<8x8xf32> -> vector<8x8xf32>
    %c0_22 = arith.constant 0 : index
    %c0_23 = arith.constant 0 : index
    %35 = vector.load %arg10[%c0_22, %c0_23] : memref<8x32xf32, #tpu.memory_space<vmem>>, vector<8x8xf32>
    tpu.vector_store %arg10[%c0_22, %c0_23], %34 {strides = array<i32>} : memref<8x32xf32, #tpu.memory_space<vmem>>, vector<8x8xf32>,
    %36 = vector.extract_strided_slice %1 {offsets = [0, 8], sizes = [8, 8], strides = [1, 1]} : vector<8x32xf32> to vector<8x8xf32>
    %37 = vector.extract_strided_slice %3 {offsets = [0, 8], sizes = [8, 8], strides = [1, 1]} : vector<8x32xf32> to vector<8x8xf32>
    %38 = vector.extract_strided_slice %5 {offsets = [0, 8], sizes = [8, 8], strides = [1, 1]} : vector<8x32xf32> to vector<8x8xf32>
    %cst_24 = arith.constant dense<0.000000e+00> : vector<8x8xf32>
    %39 = tpu.matmul %36, %37, %cst_24 {dimension_numbers = #tpu.dot_dimension_numbers<[1], [1], [0], [0], [0, 0, 1, 0], [], []>} : vector<8x8xf32>, vector<8x8xf32>, vector<8x8xf32> -> vector<8x8xf32>
    %cst_25 = arith.constant 0.353553385 : f32
    %40 = vector.broadcast %cst_25 : f32 to vector<8x8xf32>
    %41 = arith.mulf %39, %40 : vector<8x8xf32>
    %42 = vector.broadcast %12 : vector<1x8xf32> to vector<8x8xf32>
    %43 = arith.addf %41, %42 : vector<8x8xf32>
    %cst_26 = arith.constant dense<0xFF800000> : vector<8xf32>
    %44 = vector.multi_reduction <maximumf>, %43, %cst_26 [1] : vector<8x8xf32> to vector<8xf32>
    %45 = vector.shape_cast %44 : vector<8xf32> to vector<8x1xf32>
    %46 = vector.broadcast %45 : vector<8x1xf32> to vector<8x8xf32>
    %47 = arith.subf %43, %46 : vector<8x8xf32>
    %48 = math.exp %47 : vector<8x8xf32>
    %cst_27 = arith.constant dense<0.000000e+00> : vector<8xf32>
    %49 = vector.multi_reduction <add>, %48, %cst_27 [1] : vector<8x8xf32> to vector<8xf32>
    %50 = vector.shape_cast %49 : vector<8xf32> to vector<8x1xf32>
    %51 = tpu.reciprocal %50 {approx = true} : vector<8x1xf32> -> vector<8x1xf32>
    %52 = vector.broadcast %51 : vector<8x1xf32> to vector<8x8xf32>
    %53 = arith.mulf %48, %52 : vector<8x8xf32>
    %c0_28 = arith.constant 0 : index
    %c1 = arith.constant 1 : index
    %c0_29 = arith.constant 0 : index
    %c0_30 = arith.constant 0 : index
    %54 = vector.load %arg9[%c0_28, %c1, %c0_29, %c0_30] : memref<1x4x8x8xf32, #tpu.memory_space<vmem>>, vector<1x1x8x8xf32>
    %55 = vector.shape_cast %54 : vector<1x1x8x8xf32> to vector<8x8xf32>
    %56 = vector.shape_cast %53 : vector<8x8xf32> to vector<1x1x8x8xf32>
    tpu.vector_store %arg9[%c0_28, %c1, %c0_29, %c0_30], %56 {strides = array<i32>} : memref<1x4x8x8xf32, #tpu.memory_space<vmem>>, vector<1x1x8x8xf32>,
    %cst_31 = arith.constant dense<0.000000e+00> : vector<8x8xf32>
    %57 = tpu.matmul %53, %38, %cst_31 {dimension_numbers = #tpu.dot_dimension_numbers<[1], [0], [0], [1], [0, 0, 1, 1], [], []>} : vector<8x8xf32>, vector<8x8xf32>, vector<8x8xf32> -> vector<8x8xf32>
    %c0_32 = arith.constant 0 : index
    %c8 = arith.constant 8 : index
    %58 = vector.load %arg10[%c0_32, %c8] : memref<8x32xf32, #tpu.memory_space<vmem>>, vector<8x8xf32>
    tpu.vector_store %arg10[%c0_32, %c8], %57 {strides = array<i32>} : memref<8x32xf32, #tpu.memory_space<vmem>>, vector<8x8xf32>,
    %59 = vector.extract_strided_slice %1 {offsets = [0, 16], sizes = [8, 8], strides = [1, 1]} : vector<8x32xf32> to vector<8x8xf32>
    %60 = vector.extract_strided_slice %3 {offsets = [0, 16], sizes = [8, 8], strides = [1, 1]} : vector<8x32xf32> to vector<8x8xf32>
    %61 = vector.extract_strided_slice %5 {offsets = [0, 16], sizes = [8, 8], strides = [1, 1]} : vector<8x32xf32> to vector<8x8xf32>
    %cst_33 = arith.constant dense<0.000000e+00> : vector<8x8xf32>
    %62 = tpu.matmul %59, %60, %cst_33 {dimension_numbers = #tpu.dot_dimension_numbers<[1], [1], [0], [0], [0, 0, 1, 0], [], []>} : vector<8x8xf32>, vector<8x8xf32>, vector<8x8xf32> -> vector<8x8xf32>
    %cst_34 = arith.constant 0.353553385 : f32
    %63 = vector.broadcast %cst_34 : f32 to vector<8x8xf32>
    %64 = arith.mulf %62, %63 : vector<8x8xf32>
    %65 = vector.broadcast %12 : vector<1x8xf32> to vector<8x8xf32>
    %66 = arith.addf %64, %65 : vector<8x8xf32>
    %cst_35 = arith.constant dense<0xFF800000> : vector<8xf32>
    %67 = vector.multi_reduction <maximumf>, %66, %cst_35 [1] : vector<8x8xf32> to vector<8xf32>
    %68 = vector.shape_cast %67 : vector<8xf32> to vector<8x1xf32>
    %69 = vector.broadcast %68 : vector<8x1xf32> to vector<8x8xf32>
    %70 = arith.subf %66, %69 : vector<8x8xf32>
    %71 = math.exp %70 : vector<8x8xf32>
    %cst_36 = arith.constant dense<0.000000e+00> : vector<8xf32>
    %72 = vector.multi_reduction <add>, %71, %cst_36 [1] : vector<8x8xf32> to vector<8xf32>
    %73 = vector.shape_cast %72 : vector<8xf32> to vector<8x1xf32>
    %74 = tpu.reciprocal %73 {approx = true} : vector<8x1xf32> -> vector<8x1xf32>
    %75 = vector.broadcast %74 : vector<8x1xf32> to vector<8x8xf32>
    %76 = arith.mulf %71, %75 : vector<8x8xf32>
    %c0_37 = arith.constant 0 : index
    %c2 = arith.constant 2 : index
    %c0_38 = arith.constant 0 : index
    %c0_39 = arith.constant 0 : index
    %77 = vector.load %arg9[%c0_37, %c2, %c0_38, %c0_39] : memref<1x4x8x8xf32, #tpu.memory_space<vmem>>, vector<1x1x8x8xf32>
    %78 = vector.shape_cast %77 : vector<1x1x8x8xf32> to vector<8x8xf32>
    %79 = vector.shape_cast %76 : vector<8x8xf32> to vector<1x1x8x8xf32>
    tpu.vector_store %arg9[%c0_37, %c2, %c0_38, %c0_39], %79 {strides = array<i32>} : memref<1x4x8x8xf32, #tpu.memory_space<vmem>>, vector<1x1x8x8xf32>,
    %cst_40 = arith.constant dense<0.000000e+00> : vector<8x8xf32>
    %80 = tpu.matmul %76, %61, %cst_40 {dimension_numbers = #tpu.dot_dimension_numbers<[1], [0], [0], [1], [0, 0, 1, 1], [], []>} : vector<8x8xf32>, vector<8x8xf32>, vector<8x8xf32> -> vector<8x8xf32>
    %c0_41 = arith.constant 0 : index
    %c16 = arith.constant 16 : index
    %81 = vector.load %arg10[%c0_41, %c16] : memref<8x32xf32, #tpu.memory_space<vmem>>, vector<8x8xf32>
    tpu.vector_store %arg10[%c0_41, %c16], %80 {strides = array<i32>} : memref<8x32xf32, #tpu.memory_space<vmem>>, vector<8x8xf32>,
    %82 = vector.extract_strided_slice %1 {offsets = [0, 24], sizes = [8, 8], strides = [1, 1]} : vector<8x32xf32> to vector<8x8xf32>
    %83 = vector.extract_strided_slice %3 {offsets = [0, 24], sizes = [8, 8], strides = [1, 1]} : vector<8x32xf32> to vector<8x8xf32>
    %84 = vector.extract_strided_slice %5 {offsets = [0, 24], sizes = [8, 8], strides = [1, 1]} : vector<8x32xf32> to vector<8x8xf32>
    %cst_42 = arith.constant dense<0.000000e+00> : vector<8x8xf32>
    %85 = tpu.matmul %82, %83, %cst_42 {dimension_numbers = #tpu.dot_dimension_numbers<[1], [1], [0], [0], [0, 0, 1, 0], [], []>} : vector<8x8xf32>, vector<8x8xf32>, vector<8x8xf32> -> vector<8x8xf32>
    %cst_43 = arith.constant 0.353553385 : f32
    %86 = vector.broadcast %cst_43 : f32 to vector<8x8xf32>
    %87 = arith.mulf %85, %86 : vector<8x8xf32>
    %88 = vector.broadcast %12 : vector<1x8xf32> to vector<8x8xf32>
    %89 = arith.addf %87, %88 : vector<8x8xf32>
    %cst_44 = arith.constant dense<0xFF800000> : vector<8xf32>
    %90 = vector.multi_reduction <maximumf>, %89, %cst_44 [1] : vector<8x8xf32> to vector<8xf32>
    %91 = vector.shape_cast %90 : vector<8xf32> to vector<8x1xf32>
    %92 = vector.broadcast %91 : vector<8x1xf32> to vector<8x8xf32>
    %93 = arith.subf %89, %92 : vector<8x8xf32>
    %94 = math.exp %93 : vector<8x8xf32>
    %cst_45 = arith.constant dense<0.000000e+00> : vector<8xf32>
    %95 = vector.multi_reduction <add>, %94, %cst_45 [1] : vector<8x8xf32> to vector<8xf32>
    %96 = vector.shape_cast %95 : vector<8xf32> to vector<8x1xf32>
    %97 = tpu.reciprocal %96 {approx = true} : vector<8x1xf32> -> vector<8x1xf32>
    %98 = vector.broadcast %97 : vector<8x1xf32> to vector<8x8xf32>
    %99 = arith.mulf %94, %98 : vector<8x8xf32>
    %c0_46 = arith.constant 0 : index
    %c3 = arith.constant 3 : index
    %c0_47 = arith.constant 0 : index
    %c0_48 = arith.constant 0 : index
    %100 = vector.load %arg9[%c0_46, %c3, %c0_47, %c0_48] : memref<1x4x8x8xf32, #tpu.memory_space<vmem>>, vector<1x1x8x8xf32>
    %101 = vector.shape_cast %100 : vector<1x1x8x8xf32> to vector<8x8xf32>
    %102 = vector.shape_cast %99 : vector<8x8xf32> to vector<1x1x8x8xf32>
    tpu.vector_store %arg9[%c0_46, %c3, %c0_47, %c0_48], %102 {strides = array<i32>} : memref<1x4x8x8xf32, #tpu.memory_space<vmem>>, vector<1x1x8x8xf32>,
    %cst_49 = arith.constant dense<0.000000e+00> : vector<8x8xf32>
    %103 = tpu.matmul %99, %84, %cst_49 {dimension_numbers = #tpu.dot_dimension_numbers<[1], [0], [0], [1], [0, 0, 1, 1], [], []>} : vector<8x8xf32>, vector<8x8xf32>, vector<8x8xf32> -> vector<8x8xf32>
    %c0_50 = arith.constant 0 : index
    %c24 = arith.constant 24 : index
    %104 = vector.load %arg10[%c0_50, %c24] : memref<8x32xf32, #tpu.memory_space<vmem>>, vector<8x8xf32>
    tpu.vector_store %arg10[%c0_50, %c24], %103 {strides = array<i32>} : memref<8x32xf32, #tpu.memory_space<vmem>>, vector<8x8xf32>,
    %c0_51 = arith.constant 0 : index
    %c0_52 = arith.constant 0 : index
    %105 = vector.load %arg10[%c0_51, %c0_52] : memref<8x32xf32, #tpu.memory_space<vmem>>, vector<8x32xf32>
    %c0_53 = arith.constant 0 : index
    %c0_54 = arith.constant 0 : index
    %106 = vector.load %arg6[%c0_53, %c0_54] : memref<32x32xf32, #tpu.memory_space<vmem>>, vector<32x32xf32>
    %cst_55 = arith.constant dense<0.000000e+00> : vector<8x32xf32>
    %107 = tpu.matmul %105, %106, %cst_55 {dimension_numbers = #tpu.dot_dimension_numbers<[1], [0], [0], [1], [0, 0, 1, 1], [], []>} : vector<8x32xf32>, vector<32x32xf32>, vector<8x32xf32> -> vector<8x32xf32>
    %c0_56 = arith.constant 0 : index
    %c0_57 = arith.constant 0 : index
    %c0_58 = arith.constant 0 : index
    %108 = vector.load %arg5[%c0_56, %c0_57, %c0_58] : memref<1x8x32xf32, #tpu.memory_space<vmem>>, vector<1x8x32xf32>
    %109 = vector.shape_cast %108 : vector<1x8x32xf32> to vector<8x32xf32>
    %110 = arith.addf %109, %107 : vector<8x32xf32>
    %c0_59 = arith.constant 0 : index
    %c0_60 = arith.constant 0 : index
    %111 = vector.load %arg7[%c0_59, %c0_60] : memref<1x32xf32, #tpu.memory_space<vmem>>, vector<1x32xf32>
    %112 = vector.broadcast %111 : vector<1x32xf32> to vector<8x32xf32>
    %113 = arith.addf %110, %112 : vector<8x32xf32>
    %c0_61 = arith.constant 0 : index
    %c0_62 = arith.constant 0 : index
    %c0_63 = arith.constant 0 : index
    %114 = vector.load %arg8[%c0_61, %c0_62, %c0_63] : memref<1x8x32xf32, #tpu.memory_space<vmem>>, vector<1x8x32xf32>
    %115 = vector.shape_cast %114 : vector<1x8x32xf32> to vector<8x32xf32>
    %116 = vector.shape_cast %113 : vector<8x32xf32> to vector<1x8x32xf32>
    tpu.vector_store %arg8[%c0_61, %c0_62, %c0_63], %116 {strides = array<i32>} : memref<1x8x32xf32, #tpu.memory_space<vmem>>, vector<1x8x32xf32>,
    return
  }
  func.func @transform_0(%arg0: i32) -> (i32, i32, i32) {
    %c0_i32 = arith.constant 0 : i32
    %c0_i32_0 = arith.constant 0 : i32
    %c0_i32_1 = arith.constant 0 : i32
    return %arg0, %c0_i32, %c0_i32_0 : i32, i32, i32
  }
  func.func @transform_1(%arg0: i32) -> (i32, i32, i32) {
    %c0_i32 = arith.constant 0 : i32
    %c0_i32_0 = arith.constant 0 : i32
    %c0_i32_1 = arith.constant 0 : i32
    return %arg0, %c0_i32, %c0_i32_0 : i32, i32, i32
  }
  func.func @transform_2(%arg0: i32) -> (i32, i32, i32) {
    %c0_i32 = arith.constant 0 : i32
    %c0_i32_0 = arith.constant 0 : i32
    %c0_i32_1 = arith.constant 0 : i32
    return %arg0, %c0_i32, %c0_i32_0 : i32, i32, i32
  }
  func.func @transform_3(%arg0: i32) -> (i32, i32, i32) {
    %c0_i32 = arith.constant 0 : i32
    %c0_i32_0 = arith.constant 0 : i32
    %c0_i32_1 = arith.constant 0 : i32
    return %arg0, %c0_i32, %c0_i32_0 : i32, i32, i32
  }
  func.func @transform_4(%arg0: i32) -> (i32, i32, i32) {
    %c0_i32 = arith.constant 0 : i32
    %c0_i32_0 = arith.constant 0 : i32
    %c0_i32_1 = arith.constant 0 : i32
    return %arg0, %c0_i32, %c0_i32_0 : i32, i32, i32
  }
  func.func @transform_5(%arg0: i32) -> (i32, i32) {
    %c0_i32 = arith.constant 0 : i32
    %c0_i32_0 = arith.constant 0 : i32
    %c0_i32_1 = arith.constant 0 : i32
    return %c0_i32, %c0_i32_0 : i32, i32
  }
  func.func @transform_6(%arg0: i32) -> (i32, i32) {
    %c0_i32 = arith.constant 0 : i32
    %c0_i32_0 = arith.constant 0 : i32
    %c0_i32_1 = arith.constant 0 : i32
    return %c0_i32, %c0_i32_0 : i32, i32
  }
  func.func @transform_7(%arg0: i32) -> (i32, i32, i32) {
    %c0_i32 = arith.constant 0 : i32
    %c0_i32_0 = arith.constant 0 : i32
    %c0_i32_1 = arith.constant 0 : i32
    return %arg0, %c0_i32, %c0_i32_0 : i32, i32, i32
  }
  func.func @transform_8(%arg0: i32) -> (i32, i32, i32, i32) {
    %c0_i32 = arith.constant 0 : i32
    %c0_i32_0 = arith.constant 0 : i32
    %c0_i32_1 = arith.constant 0 : i32
    %c0_i32_2 = arith.constant 0 : i32
    return %arg0, %c0_i32, %c0_i32_0, %c0_i32_1 : i32, i32, i32, i32
  }
}

module attributes {stable_mosaic.version = 11 : i64} {
  func.func @ln_ffn_kernel(%arg0: i32, %arg1: memref<8x32xf32, #tpu.memory_space<vmem>>, %arg2: memref<1x32xf32, #tpu.memory_space<vmem>>, %arg3: memref<1x32xf32, #tpu.memory_space<vmem>>, %arg4: memref<32x64xf32, #tpu.memory_space<vmem>>, %arg5: memref<1x64xf32, #tpu.memory_space<vmem>>, %arg6: memref<64x32xf32, #tpu.memory_space<vmem>>, %arg7: memref<1x32xf32, #tpu.memory_space<vmem>>, %arg8: memref<8x32xf32, #tpu.memory_space<vmem>>) attributes {dimension_semantics = [#tpu.dimension_semantics<parallel>], iteration_bounds = array<i64: 1>, scalar_prefetch = 0 : i64, scratch_operands = 0 : i64, tpu.core_type = #tpu.core_type<tc>, window_params = [{transform_indices = @transform_0, window_bounds = array<i64: 8, 32>}, {pipeline_mode = #tpu.pipeline_mode<synchronous>, transform_indices = @transform_1, window_bounds = array<i64: 1, 32>}, {pipeline_mode = #tpu.pipeline_mode<synchronous>, transform_indices = @transform_2, window_bounds = array<i64: 1, 32>}, {pipeline_mode = #tpu.pipeline_mode<synchronous>, transform_indices = @transform_3, window_bounds = array<i64: 32, 64>}, {pipeline_mode = #tpu.pipeline_mode<synchronous>, transform_indices = @transform_4, window_bounds = array<i64: 1, 64>}, {pipeline_mode = #tpu.pipeline_mode<synchronous>, transform_indices = @transform_5, window_bounds = array<i64: 64, 32>}, {pipeline_mode = #tpu.pipeline_mode<synchronous>, transform_indices = @transform_6, window_bounds = array<i64: 1, 32>}, {transform_indices = @transform_7, window_bounds = array<i64: 8, 32>}]} {
    %c0 = arith.constant 0 : index
    %c0_0 = arith.constant 0 : index
    %0 = vector.load %arg1[%c0, %c0_0] : memref<8x32xf32, #tpu.memory_space<vmem>>, vector<8x32xf32>
    %cst = arith.constant dense<0.000000e+00> : vector<8xf32>
    %1 = vector.multi_reduction <add>, %0, %cst [1] : vector<8x32xf32> to vector<8xf32>
    %2 = vector.shape_cast %1 : vector<8xf32> to vector<8x1xf32>
    %cst_1 = arith.constant 3.200000e+01 : f32
    %3 = vector.broadcast %cst_1 : f32 to vector<8x1xf32>
    %4 = arith.divf %2, %3 : vector<8x1xf32>
    %5 = vector.broadcast %4 : vector<8x1xf32> to vector<8x32xf32>
    %6 = arith.subf %0, %5 : vector<8x32xf32>
    %7 = arith.mulf %6, %6 : vector<8x32xf32>
    %cst_2 = arith.constant dense<0.000000e+00> : vector<8xf32>
    %8 = vector.multi_reduction <add>, %7, %cst_2 [1] : vector<8x32xf32> to vector<8xf32>
    %9 = vector.shape_cast %8 : vector<8xf32> to vector<8x1xf32>
    %cst_3 = arith.constant 3.100000e+01 : f32
    %10 = vector.broadcast %cst_3 : f32 to vector<8x1xf32>
    %11 = arith.divf %9, %10 : vector<8x1xf32>
    %12 = math.sqrt %11 : vector<8x1xf32>
    %c0_4 = arith.constant 0 : index
    %c0_5 = arith.constant 0 : index
    %13 = vector.load %arg2[%c0_4, %c0_5] : memref<1x32xf32, #tpu.memory_space<vmem>>, vector<1x32xf32>
    %14 = vector.broadcast %13 : vector<1x32xf32> to vector<8x32xf32>
    %15 = arith.mulf %14, %6 : vector<8x32xf32>
    %cst_6 = arith.constant 9.99999997E-7 : f32
    %16 = vector.broadcast %cst_6 : f32 to vector<8x1xf32>
    %17 = arith.addf %12, %16 : vector<8x1xf32>
    %18 = vector.broadcast %17 : vector<8x1xf32> to vector<8x32xf32>
    %19 = arith.divf %15, %18 : vector<8x32xf32>
    %c0_7 = arith.constant 0 : index
    %c0_8 = arith.constant 0 : index
    %20 = vector.load %arg3[%c0_7, %c0_8] : memref<1x32xf32, #tpu.memory_space<vmem>>, vector<1x32xf32>
    %21 = vector.broadcast %20 : vector<1x32xf32> to vector<8x32xf32>
    %22 = arith.addf %19, %21 : vector<8x32xf32>
    %cst_9 = arith.constant 0.000000e+00 : f32
    %23 = vector.broadcast %cst_9 : f32 to vector<8x32xf32>
    %c0_10 = arith.constant 0 : index
    %c0_11 = arith.constant 0 : index
    %24 = vector.load %arg7[%c0_10, %c0_11] : memref<1x32xf32, #tpu.memory_space<vmem>>, vector<1x32xf32>
    %25 = vector.broadcast %24 : vector<1x32xf32> to vector<8x32xf32>
    %26 = arith.addf %23, %25 : vector<8x32xf32>
    %c0_12 = arith.constant 0 : index
    %c0_13 = arith.constant 0 : index
    %27 = vector.load %arg4[%c0_12, %c0_13] : memref<32x64xf32, #tpu.memory_space<vmem>>, vector<32x64xf32>
    %cst_14 = arith.constant dense<0.000000e+00> : vector<8x64xf32>
    %28 = tpu.matmul %22, %27, %cst_14 {dimension_numbers = #tpu.dot_dimension_numbers<[1], [0], [0], [1], [0, 0, 1, 1], [], []>} : vector<8x32xf32>, vector<32x64xf32>, vector<8x64xf32> -> vector<8x64xf32>
    %c0_15 = arith.constant 0 : index
    %c0_16 = arith.constant 0 : index
    %29 = vector.load %arg5[%c0_15, %c0_16] : memref<1x64xf32, #tpu.memory_space<vmem>>, vector<1x64xf32>
    %30 = vector.broadcast %29 : vector<1x64xf32> to vector<8x64xf32>
    %31 = arith.addf %28, %30 : vector<8x64xf32>
    %cst_17 = arith.constant 0.000000e+00 : f32
    %32 = vector.broadcast %cst_17 : f32 to vector<8x64xf32>
    %33 = arith.maximumf %31, %32 : vector<8x64xf32>
    %c0_18 = arith.constant 0 : index
    %c0_19 = arith.constant 0 : index
    %34 = vector.load %arg6[%c0_18, %c0_19] : memref<64x32xf32, #tpu.memory_space<vmem>>, vector<64x32xf32>
    %cst_20 = arith.constant dense<0.000000e+00> : vector<8x32xf32>
    %35 = tpu.matmul %33, %34, %cst_20 {dimension_numbers = #tpu.dot_dimension_numbers<[1], [0], [0], [1], [0, 0, 1, 1], [], []>} : vector<8x64xf32>, vector<64x32xf32>, vector<8x32xf32> -> vector<8x32xf32>
    %36 = arith.addf %26, %35 : vector<8x32xf32>
    %c0_21 = arith.constant 0 : index
    %c0_22 = arith.constant 0 : index
    %37 = vector.load %arg8[%c0_21, %c0_22] : memref<8x32xf32, #tpu.memory_space<vmem>>, vector<8x32xf32>
    tpu.vector_store %arg8[%c0_21, %c0_22], %36 {strides = array<i32>} : memref<8x32xf32, #tpu.memory_space<vmem>>, vector<8x32xf32>,
    return
  }
  func.func @transform_0(%arg0: i32) -> (i32, i32) {
    %c0_i32 = arith.constant 0 : i32
    %c0_i32_0 = arith.constant 0 : i32
    return %arg0, %c0_i32 : i32, i32
  }
  func.func @transform_1(%arg0: i32) -> (i32, i32) {
    %c0_i32 = arith.constant 0 : i32
    %c0_i32_0 = arith.constant 0 : i32
    %c0_i32_1 = arith.constant 0 : i32
    return %c0_i32, %c0_i32_0 : i32, i32
  }
  func.func @transform_2(%arg0: i32) -> (i32, i32) {
    %c0_i32 = arith.constant 0 : i32
    %c0_i32_0 = arith.constant 0 : i32
    %c0_i32_1 = arith.constant 0 : i32
    return %c0_i32, %c0_i32_0 : i32, i32
  }
  func.func @transform_3(%arg0: i32) -> (i32, i32) {
    %c0_i32 = arith.constant 0 : i32
    %c0_i32_0 = arith.constant 0 : i32
    %c0_i32_1 = arith.constant 0 : i32
    return %c0_i32, %c0_i32_0 : i32, i32
  }
  func.func @transform_4(%arg0: i32) -> (i32, i32) {
    %c0_i32 = arith.constant 0 : i32
    %c0_i32_0 = arith.constant 0 : i32
    %c0_i32_1 = arith.constant 0 : i32
    return %c0_i32, %c0_i32_0 : i32, i32
  }
  func.func @transform_5(%arg0: i32) -> (i32, i32) {
    %c0_i32 = arith.constant 0 : i32
    %c0_i32_0 = arith.constant 0 : i32
    %c0_i32_1 = arith.constant 0 : i32
    return %c0_i32, %c0_i32_0 : i32, i32
  }
  func.func @transform_6(%arg0: i32) -> (i32, i32) {
    %c0_i32 = arith.constant 0 : i32
    %c0_i32_0 = arith.constant 0 : i32
    %c0_i32_1 = arith.constant 0 : i32
    return %c0_i32, %c0_i32_0 : i32, i32
  }
  func.func @transform_7(%arg0: i32) -> (i32, i32) {
    %c0_i32 = arith.constant 0 : i32
    %c0_i32_0 = arith.constant 0 : i32
    return %arg0, %c0_i32 : i32, i32
  }
}

module attributes {stable_mosaic.version = 11 : i64} {
  func.func @residual_bcast_kernel(%arg0: i32, %arg1: memref<1x8x32xf32, #tpu.memory_space<vmem>>, %arg2: memref<8x32xf32, #tpu.memory_space<vmem>>, %arg3: memref<1x8x32xf32, #tpu.memory_space<vmem>>) attributes {dimension_semantics = [#tpu.dimension_semantics<parallel>], iteration_bounds = array<i64: 2>, scalar_prefetch = 0 : i64, scratch_operands = 0 : i64, tpu.core_type = #tpu.core_type<tc>, window_params = [{transform_indices = @transform_0, window_bounds = array<i64: 1, 8, 32>}, {pipeline_mode = #tpu.pipeline_mode<synchronous>, transform_indices = @transform_1, window_bounds = array<i64: 8, 32>}, {transform_indices = @transform_2, window_bounds = array<i64: 1, 8, 32>}]} {
    %c0 = arith.constant 0 : index
    %c0_0 = arith.constant 0 : index
    %c0_1 = arith.constant 0 : index
    %0 = vector.load %arg1[%c0, %c0_0, %c0_1] : memref<1x8x32xf32, #tpu.memory_space<vmem>>, vector<1x8x32xf32>
    %1 = vector.shape_cast %0 : vector<1x8x32xf32> to vector<8x32xf32>
    %c0_2 = arith.constant 0 : index
    %c0_3 = arith.constant 0 : index
    %2 = vector.load %arg2[%c0_2, %c0_3] : memref<8x32xf32, #tpu.memory_space<vmem>>, vector<8x32xf32>
    %3 = arith.addf %1, %2 : vector<8x32xf32>
    %c0_4 = arith.constant 0 : index
    %c0_5 = arith.constant 0 : index
    %c0_6 = arith.constant 0 : index
    %4 = vector.load %arg3[%c0_4, %c0_5, %c0_6] : memref<1x8x32xf32, #tpu.memory_space<vmem>>, vector<1x8x32xf32>
    %5 = vector.shape_cast %4 : vector<1x8x32xf32> to vector<8x32xf32>
    %6 = vector.shape_cast %3 : vector<8x32xf32> to vector<1x8x32xf32>
    tpu.vector_store %arg3[%c0_4, %c0_5, %c0_6], %6 {strides = array<i32>} : memref<1x8x32xf32, #tpu.memory_space<vmem>>, vector<1x8x32xf32>,
    return
  }
  func.func @transform_0(%arg0: i32) -> (i32, i32, i32) {
    %c0_i32 = arith.constant 0 : i32
    %c0_i32_0 = arith.constant 0 : i32
    %c0_i32_1 = arith.constant 0 : i32
    return %arg0, %c0_i32, %c0_i32_0 : i32, i32, i32
  }
  func.func @transform_1(%arg0: i32) -> (i32, i32) {
    %c0_i32 = arith.constant 0 : i32
    %c0_i32_0 = arith.constant 0 : i32
    %c0_i32_1 = arith.constant 0 : i32
    return %c0_i32, %c0_i32_0 : i32, i32
  }
  func.func @transform_2(%arg0: i32) -> (i32, i32, i32) {
    %c0_i32 = arith.constant 0 : i32
    %c0_i32_0 = arith.constant 0 : i32
    %c0_i32_1 = arith.constant 0 : i32
    return %arg0, %c0_i32, %c0_i32_0 : i32, i32, i32
  }
}

</mosaic_0001>

<llo_original>
// kernel: encoder_layer_forward.4
$region0: #{encoder_layer_forward.4}
  #allocation0 [shape = 'u32[]', space=smem, size = 0x4, offset = 0x4, fixed_abs, tag = 'smem constant byte address 0x4 - core index']
  #allocation1 [shape = 'u32[144,128]{1,0:T(1,128)}', space=vmem, size = 0x12000, scoped, tag = 'internal scratch']
  %s0 = inlined_call_operand.vmem [shape: f32[16,32], index: 0, kind: input, shape index: {}]
  %s1 = inlined_call_operand.vmem [shape: f32[1,32], index: 1, kind: input, shape index: {}]
  %s2 = inlined_call_operand.vmem [shape: f32[1,32], index: 2, kind: input, shape index: {}]
  %s3 = inlined_call_operand.vmem [shape: f32[32,96], index: 3, kind: input, shape index: {}]
  %s4 = inlined_call_operand.vmem [shape: f32[1,96], index: 4, kind: input, shape index: {}]
  %s5 = inlined_call_operand.vmem [shape: f32[16,32], index: 5, kind: output, shape index: {0}]
  %s6 = inlined_call_operand.vmem [shape: f32[16,32], index: 6, kind: output, shape index: {1}]
  %s7 = inlined_call_operand.vmem [shape: f32[16,32], index: 7, kind: output, shape index: {2}]
  %8 = xla_tuple %s5, %s6, %s7
  %s9 = sld [smem:[#allocation0]]
  $region46: #{encoder_layer_forward.4} parent=0
    _
  %s11 = ssub.s32 1, %s9
  %s12 = scalar_select 0, %s11, %s9
  // Predicated region
  $region2: #{encoder_layer_forward.4} parent=0 // pred_check
    _
  $region3: #{encoder_layer_forward.4} parent=0 // pred_check_branch
    %14 = sbr.rel (0) target = $region5
  $region4: #{encoder_layer_forward.4} parent=0 // pred_region
    _
  $region5: #{encoder_layer_forward.4} parent=0 // pred_fallthru
    _
  // Predicated region
  $region6: #{encoder_layer_forward.4} parent=0 // pred_check
    _
  $region7: #{encoder_layer_forward.4} parent=0 // pred_check_branch
    %16 = sbr.rel (0) target = $region9
  $region8: #{encoder_layer_forward.4} parent=0 // pred_region
    _
  $region9: #{encoder_layer_forward.4} parent=0 // pred_fallthru
    _
  // Predicated region
  $region10: #{encoder_layer_forward.4} parent=0 // pred_check
    _
  $region11: #{encoder_layer_forward.4} parent=0 // pred_check_branch
    %18 = sbr.rel (0) target = $region13
  $region12: #{encoder_layer_forward.4} parent=0 // pred_region
    _
  $region13: #{encoder_layer_forward.4} parent=0 // pred_fallthru
    _
  // Predicated region
  $region14: #{encoder_layer_forward.4} parent=0 // pred_check
    _
  $region15: #{encoder_layer_forward.4} parent=0 // pred_check_branch
    %20 = sbr.rel (0) target = $region17
  $region16: #{encoder_layer_forward.4} parent=0 // pred_region
    _
  $region17: #{encoder_layer_forward.4} parent=0 // pred_fallthru
    _
  // Predicated region
  $region18: #{encoder_layer_forward.4} parent=0 // pred_check
    _
  $region19: #{encoder_layer_forward.4} parent=0 // pred_check_branch
    %22 = sbr.rel (0) target = $region21
  $region20: #{encoder_layer_forward.4} parent=0 // pred_region
    _
  $region21: #{encoder_layer_forward.4} parent=0 // pred_fallthru
    _
  %v23 = vld [vmem:[%s0] sm:$0xff]
  %v24 = vld [vmem:[%s0 + $0x8] sm:$0xff]
  %vm25 = vcmask 261120
  %v26 = vsel %vm25, %v23, 0.0
  %27 = vadd.xlane.f32.xlu0 %v26
  %v28 = vpop.xlane.xlu0 %27
  %v29 = vsel %vm25, %v24, 0.0
  %30 = vadd.xlane.f32.xlu0 %v29
  %v31 = vpop.xlane.xlu0 %30
  %v32 = vrcp.pop 32.0
  %v33 = vmul.f32 %v28, %v32
  %v34 = vmul.f32 %v31, %v32
  %v35 = vsub.f32 %v23, %v33
  %v36 = vsub.f32 %v24, %v34
  %v37 = vmul.f32 %v35, %v35
  %v38 = vmul.f32 %v36, %v36
  %v39 = vsel %vm25, %v37, 0.0
  %40 = vadd.xlane.f32.xlu0 %v39
  %v41 = vpop.xlane.xlu0 %40
  %v42 = vsel %vm25, %v38, 0.0
  %43 = vadd.xlane.f32.xlu0 %v42
  %v44 = vpop.xlane.xlu0 %43
  %v45 = vrcp.pop 31.0
  %v46 = vmul.f32 %v41, %v45
  %v47 = vmul.f32 %v44, %v45
  %v48 = vrsqrt.pop %v46
  %v49 = vmul.f32 %v46, %v48
  %vm50 = vcmp.eq.f32.partialorder %v46, inf
  %v51 = vsel %vm50, %v46, %v49
  %vm52 = vcmp.eq.f32.partialorder %v46, 0.0
  %v53 = vand.u32 %v46, 2147483648
  %v54 = vsel %vm52, %v53, %v51
  %v55 = vrsqrt.pop %v47
  %v56 = vmul.f32 %v47, %v55
  %vm57 = vcmp.eq.f32.partialorder %v47, inf
  %v58 = vsel %vm57, %v47, %v56
  %vm59 = vcmp.eq.f32.partialorder %v47, 0.0
  %v60 = vand.u32 %v47, 2147483648
  %v61 = vsel %vm59, %v60, %v58
  %v62 = vld [vmem:[%s1] sm:$0x1]
  %v64 = vlaneseq
  %v65 = vshrl.u32 %v64, 7
  %v66 = vsub.s32 0, %v65
  %v67 = vrot.slane %v62, %v66
  %v69 = vmul.f32 %v67, %v35
  %v70 = vmul.f32 %v67, %v36
  %v71 = vadd.f32 %v54, 1e-06
  %v72 = vadd.f32 %v61, 1e-06
  %v73 = vrcp.pop %v71
  %v74 = vmul.f32 %v69, %v73
  %v75 = vrcp.pop %v72
  %v76 = vmul.f32 %v70, %v75
  %v77 = vld [vmem:[%s2] sm:$0x1]
  %v79 = vlaneseq
  %v80 = vshrl.u32 %v79, 7
  %v81 = vsub.s32 0, %v80
  %v82 = vrot.slane %v77, %v81
  %v84 = vadd.f32 %v74, %v82
  %v85 = vadd.f32 %v76, %v82
  %v86 = vld [vmem:[%s3] sm:$0xff]
  %v87 = vld [vmem:[%s3 + $0x8] sm:$0xff]
  %v88 = vld [vmem:[%s3 + $0x10] sm:$0xff]
  %v89 = vld [vmem:[%s3 + $0x18] sm:$0xff]
  %v90 = vld [vmem:[%s4] sm:$0x1]
  %v92 = vlaneseq
  %v93 = vshrl.u32 %v92, 7
  %v94 = vsub.s32 0, %v93
  %v95 = vrot.slane %v90, %v94
  %v98 = vsel %vm25, %v84, 0
  %v101 = vsel %vm25, %v85, 0
  %103 = vmatprep.subr.mxu0 0.0
  %104 = vmatpush1.msra.mxu0 %v86
  %105 = vmatprep.subr.mxu0 0.0
  %106 = vmatpush1.msra.mxu0 %v87
  %107 = vmatprep.subr.mxu0 0.0
  %108 = vmatpush1.msra.mxu0 %v88
  %109 = vmatprep.subr.mxu0 0.0
  %110 = vmatpush1.msra.mxu0 %v89
  %111 = vmatprep.subr.mxu0 0.0
  %112 = vmatpush1.msra.mxu0 0.0
  %113 = vmatprep.subr.mxu0 0.0
  %114 = vmatpush1.msra.mxu0 0.0
  %115 = vmatprep.subr.mxu0 0.0
  %116 = vmatpush1.msra.mxu0 0.0
  %117 = vmatprep.subr.mxu0 0.0
  %118 = vmatpush1.msra.mxu0 0.0
  %119 = vmatprep.subr.mxu0 0.0
  %120 = vmatpush1.msra.mxu0 0.0
  %121 = vmatprep.subr.mxu0 0.0
  %122 = vmatpush1.msra.mxu0 0.0
  %123 = vmatprep.subr.mxu0 0.0
  %124 = vmatpush1.msra.mxu0 0.0
  %125 = vmatprep.subr.mxu0 0.0
  %126 = vmatpush1.msra.mxu0 0.0
  %127 = vmatprep.subr.mxu0 0.0
  %128 = vmatpush1.msra.mxu0 0.0
  %129 = vmatprep.subr.mxu0 0.0
  %130 = vmatpush1.msra.mxu0 0.0
  %131 = vmatprep.subr.mxu0 0.0
  %132 = vmatpush1.msra.mxu0 0.0
  %133 = vmatprep.subr.mxu0 0.0
  %134 = vmatpush1.msra.mxu0 0.0
  %135 = vmatprep.subr.mxu0 0.0
  %136 = vmatpush1.msra.mxu0 0.0
  %137 = vmatprep.subr.mxu0 0.0
  %138 = vmatpush1.msra.mxu0 0.0
  %139 = vmatprep.subr.mxu0 0.0
  %140 = vmatpush1.msra.mxu0 0.0
  %141 = vmatprep.subr.mxu0 0.0
  %142 = vmatpush1.msra.mxu0 0.0
  %143 = vmatprep.subr.mxu0 0.0
  %144 = vmatpush1.msra.mxu0 0.0
  %145 = vmatprep.subr.mxu0 0.0
  %146 = vmatpush1.msra.mxu0 0.0
  %147 = vmatprep.subr.mxu0 0.0
  %148 = vmatpush1.msra.mxu0 0.0
  %149 = vmatprep.subr.mxu0 0.0
  %150 = vmatpush1.msra.mxu0 0.0
  %151 = vmatprep.subr.mxu0 0.0
  %152 = vmatpush1.msra.mxu0 0.0
  %153 = vmatprep.subr.mxu0 0.0
  %154 = vmatpush1.msra.mxu0 0.0
  %155 = vmatprep.subr.mxu0 0.0
  %156 = vmatpush1.msra.mxu0 0.0
  %157 = vmatprep.subr.mxu0 0.0
  %158 = vmatpush1.msra.mxu0 0.0
  %159 = vmatprep.subr.mxu0 0.0
  %160 = vmatpush1.msra.mxu0 0.0
  %161 = vmatprep.subr.mxu0 0.0
  %162 = vmatpush1.msra.mxu0 0.0
  %163 = vmatprep.subr.mxu0 0.0
  %164 = vmatpush1.msra.mxu0 0.0
  %165 = vmatprep.subr.mxu0 0.0
  %166 = vmatpush1.msra.mxu0 0.0
  %167 = vmatprep.mubr.f32.mxu0 0.0
  %168 = vmatmul.mubr.f32.gmra.mrb[0].mxu0 %v98
  %v169 = vpop.f32.mrb[0].mxu0
  %v170 = vadd.f32 %v95, %v169
  %v171 = vpop.f32.mrb[0].mxu0
  %172 = vmatprep.mubr.f32.mxu0 0.0
  %173 = vmatmul.mubr.f32.gmra.mrb[0].mxu0 %v101
  %v174 = vpop.f32.mrb[0].mxu0
  %v175 = vadd.f32 %v95, %v174
  %v176 = vpop.f32.mrb[0].mxu0
  %177 = vdwg.mxu0
  %178 = vst.msk [vmem:[%s5] sm:$0xff] %vm25, %v170
  %179 = vst.msk [vmem:[%s5 + $0x8] sm:$0xff] %vm25, %v175
  %182 = vrot.lane.b32.xlu0 %v170, 96
  %v183 = vpop.permute.xlu0 %182
  %184 = vrot.lane.b32.xlu0 %v175, 96
  %v185 = vpop.permute.xlu0 %184
  %188 = vst.msk [vmem:[%s6] sm:$0xff] %vm25, %v183
  %189 = vst.msk [vmem:[%s6 + $0x8] sm:$0xff] %vm25, %v185
  %190 = vrot.lane.b32.xlu0 %v170, 64
  %v191 = vpop.permute.xlu0 %190
  %192 = vrot.lane.b32.xlu0 %v175, 64
  %v193 = vpop.permute.xlu0 %192
  %196 = vst.msk [vmem:[%s7] sm:$0xff] %vm25, %v191
  %197 = vst.msk [vmem:[%s7 + $0x8] sm:$0xff] %vm25, %v193
  // Predicated region
  $region22: #{encoder_layer_forward.4} parent=0 // pred_check
    _
  $region23: #{encoder_layer_forward.4} parent=0 // pred_check_branch
    %199 = sbr.rel (0) target = $region25
  $region24: #{encoder_layer_forward.4} parent=0 // pred_region
    _
  $region25: #{encoder_layer_forward.4} parent=0 // pred_fallthru
    _
  // Predicated region
  $region26: #{encoder_layer_forward.4} parent=0 // pred_check
    _
  $region27: #{encoder_layer_forward.4} parent=0 // pred_check_branch
    %201 = sbr.rel (0) target = $region29
  $region28: #{encoder_layer_forward.4} parent=0 // pred_region
    _
  $region29: #{encoder_layer_forward.4} parent=0 // pred_fallthru
    _
  // Predicated region
  $region30: #{encoder_layer_forward.4} parent=0 // pred_check
    _
  $region31: #{encoder_layer_forward.4} parent=0 // pred_check_branch
    %203 = sbr.rel (0) target = $region33
  $region32: #{encoder_layer_forward.4} parent=0 // pred_region
    _
  $region33: #{encoder_layer_forward.4} parent=0 // pred_fallthru
    _
  // Predicated region
  $region34: #{encoder_layer_forward.4} parent=0 // pred_check
    _
  $region35: #{encoder_layer_forward.4} parent=0 // pred_check_branch
    %205 = sbr.rel (0) target = $region37
  $region36: #{encoder_layer_forward.4} parent=0 // pred_region
    _
  $region37: #{encoder_layer_forward.4} parent=0 // pred_fallthru
    _
  // Predicated region
  $region38: #{encoder_layer_forward.4} parent=0 // pred_check
    _
  $region39: #{encoder_layer_forward.4} parent=0 // pred_check_branch
    %207 = sbr.rel (0) target = $region41
  $region40: #{encoder_layer_forward.4} parent=0 // pred_region
    _
  $region41: #{encoder_layer_forward.4} parent=0 // pred_fallthru
    _
  // Predicated region
  $region42: #{encoder_layer_forward.4} parent=0 // pred_check
    _
  $region43: #{encoder_layer_forward.4} parent=0 // pred_check_branch
    %209 = sbr.rel (0) target = $region45
  $region44: #{encoder_layer_forward.4} parent=0 // pred_region
    _
  $region45: #{encoder_layer_forward.4} parent=0 // pred_fallthru
    _

// kernel: encoder_layer_forward.7
$region0: #{encoder_layer_forward.7}
  #allocation0 [shape = 'u32[]', space=smem, size = 0x4, offset = 0x4, fixed_abs, tag = 'smem constant byte address 0x4 - core index']
  #allocation1 [shape = 'u32[144,128]{1,0:T(1,128)}', space=vmem, size = 0x12000, scoped, tag = 'internal scratch']
  %s0 = inlined_call_operand.vmem [shape: f32[2,8,32], index: 0, kind: input, shape index: {}, may-alias: {0,2}]
  %s1 = inlined_call_operand.vmem [shape: f32[8,32], index: 1, kind: input, shape index: {}]
  %s2 = inlined_call_operand.vmem [shape: f32[2,8,32], index: 2, kind: output, shape index: {}, may-alias: {0,2}]
  %s3 = sld [smem:[#allocation0]]
  $region41: #{encoder_layer_forward.7} parent=0
    _
  %s5 = ssub.s32 1, %s3
  %s6 = scalar_select 0, %s5, %s3
  loop: start=0, step=1, limit=4
  $region2: #{encoder_layer_forward.7} parent=0 // loop_pre_header
    _
  $region3: #{encoder_layer_forward.7} parent=0 // loop_header
    %s8 = sphi 0, %s12
    %p9 = scmp.ge.s32.totalorder %s8, 4
    %s18 = sphi 0, %s20
    %s21 = sphi 0, %s18
    %s22 = sphi 0, %s21
    %s38 = sphi 0, %s22
    %s42 = sphi 0, %s42
    %s44 = sphi 0, %s42
    %s45 = sphi 0, %s44
    %s59 = sphi 0, %s45
    %s65 = sphi 0, %s67
    %s68 = sphi 0, %s65
    %s69 = sphi 0, %s68
    %s85 = sphi 0, %s69
  $region4: #{encoder_layer_forward.7} parent=0 // loop_header_branch
    %11 = sbr.rel (%p9) target = $region8
  $region5: #{encoder_layer_forward.7} parent=0 // loop_body
    %s13 = ssub.s32 %s8, 1
    %s14 = ssub.s32 %s8, 2
    %s15 = sadd.s32 %s8, 1
    %s16 = ssub.s32 %s8, %s15
    %p17 = scmp.eq.s32.totalorder %s16, 0
    %s19 = sadd.s32 %s18, 1
    %s20 = scalar_select %p17, %s18, %s19
    %p23 = pneg %p17
    %p24 = scmp.eq.s32.totalorder %s8, 1
    %p25 = por %p23, %p24
    %p26 = scmp.ne.s32.totalorder %s18, %s21
    %p27 = scmp.eq.s32.totalorder %s8, 0
    %p28 = por %p26, %p27
    %p29 = scmp.ne.s32.totalorder %s18, %s21
    %p30 = scmp.eq.s32.totalorder %s13, 1
    %p31 = por %p29, %p30
    %p32 = scmp.ne.s32.totalorder %s21, %s22
    %p33 = scmp.eq.s32.totalorder %s13, 0
    %p34 = por %p32, %p33
    %p35 = scmp.ne.s32.totalorder %s21, %s22
    %p36 = scmp.eq.s32.totalorder %s14, 1
    %p37 = por %p35, %p36
    %p39 = scmp.ne.s32.totalorder %s22, %s38
    %p40 = scmp.eq.s32.totalorder %s14, 0
    %p41 = por %p39, %p40
    %s43 = sadd.s32 %s42, 1
    %p46 = scmp.eq.s32.totalorder %s8, 1
    %p47 = scmp.ne.s32.totalorder %s42, %s44
    %p48 = scmp.eq.s32.totalorder %s8, 0
    %p49 = por %p47, %p48
    %p50 = scmp.ne.s32.totalorder %s42, %s44
    %p51 = scmp.eq.s32.totalorder %s13, 1
    %p52 = por %p50, %p51
    %p53 = scmp.ne.s32.totalorder %s44, %s45
    %p54 = scmp.eq.s32.totalorder %s13, 0
    %p55 = por %p53, %p54
    %p56 = scmp.ne.s32.totalorder %s44, %s45
    %p57 = scmp.eq.s32.totalorder %s14, 1
    %p58 = por %p56, %p57
    %p60 = scmp.ne.s32.totalorder %s45, %s59
    %p61 = scmp.eq.s32.totalorder %s14, 0
    %p62 = por %p60, %p61
    %s63 = ssub.s32 %s8, %s15
    %p64 = scmp.eq.s32.totalorder %s63, 0
    %s66 = sadd.s32 %s65, 1
    %s67 = scalar_select %p64, %s65, %s66
    %p70 = pneg %p64
    %p71 = scmp.eq.s32.totalorder %s8, 1
    %p72 = por %p70, %p71
    %p73 = scmp.ne.s32.totalorder %s65, %s68
    %p74 = scmp.eq.s32.totalorder %s8, 0
    %p75 = por %p73, %p74
    %p76 = scmp.ne.s32.totalorder %s65, %s68
    %p77 = scmp.eq.s32.totalorder %s13, 1
    %p78 = por %p76, %p77
    %p79 = scmp.ne.s32.totalorder %s68, %s69
    %p80 = scmp.eq.s32.totalorder %s13, 0
    %p81 = por %p79, %p80
    %p82 = scmp.ne.s32.totalorder %s68, %s69
    %p83 = scmp.eq.s32.totalorder %s14, 1
    %p84 = por %p82, %p83
    %p86 = scmp.ne.s32.totalorder %s69, %s85
    %p87 = scmp.eq.s32.totalorder %s14, 0
    %p88 = por %p86, %p87
    %p89 = scmp.le.s32.totalorder 1, %s8
    %p90 = scmp.lt.s32.totalorder %s8, 3
    %p91 = pnand %p89, %p90
    %p92 = pneg %p91
    // Predicated region
    $region9: #{encoder_layer_forward.7} parent=5 // pred_check
      _
    $region10: #{encoder_layer_forward.7} parent=5 // pred_check_branch
      %94 = sbr.rel (%p91) target = $region12
    $region11: #{encoder_layer_forward.7} parent=5 // pred_region
      %s95 = ssub.s32 %s8, 1
      // Predicated region
      $region13: #{encoder_layer_forward.7} parent=11 // pred_check
        %p96 = pneg %p55
      $region14: #{encoder_layer_forward.7} parent=11 // pred_check_branch
        %98 = sbr.rel (%p96) target = $region16
      $region15: #{encoder_layer_forward.7} parent=11 // pred_region
        _
      $region16: #{encoder_layer_forward.7} parent=11 // pred_fallthru
        _
    $region12: #{encoder_layer_forward.7} parent=5 // pred_fallthru
      _
    %p99 = scmp.lt.s32.totalorder %s8, 2
    // Predicated region
    $region17: #{encoder_layer_forward.7} parent=5 // pred_check
      %p100 = pneg %p99
    $region18: #{encoder_layer_forward.7} parent=5 // pred_check_branch
      %102 = sbr.rel (%p100) target = $region20
    $region19: #{encoder_layer_forward.7} parent=5 // pred_region
      // Predicated region
      $region21: #{encoder_layer_forward.7} parent=19 // pred_check
        %p103 = pneg %p28
      $region22: #{encoder_layer_forward.7} parent=19 // pred_check_branch
        %105 = sbr.rel (%p103) target = $region24
      $region23: #{encoder_layer_forward.7} parent=19 // pred_region
        %p106 = scmp.lt.s32.totalorder %s8, 1
        %s107 = scalar_select %p106, %s8, 1
        %s108 = smul.addr %s107, 8
        %s109 = scalar_lea.vmem %s0, %s108
      $region24: #{encoder_layer_forward.7} parent=19 // pred_fallthru
        _
    $region20: #{encoder_layer_forward.7} parent=5 // pred_fallthru
      _
    %p110 = scmp.le.s32.totalorder 1, %s8
    %p111 = scmp.lt.s32.totalorder %s8, 3
    %p112 = pnand %p110, %p111
    %p113 = pneg %p112
    // Predicated region
    $region25: #{encoder_layer_forward.7} parent=5 // pred_check
      _
    $region26: #{encoder_layer_forward.7} parent=5 // pred_check_branch
      %115 = sbr.rel (%p112) target = $region28
    $region27: #{encoder_layer_forward.7} parent=5 // pred_region
      %s116 = ssub.s32 %s8, 1
      %p117 = scmp.lt.s32.totalorder %s13, 1
      %s118 = scalar_select %p117, %s13, 1
      %s119 = smul.addr %s118, 8
      %s120 = scalar_lea.vmem %s0, %s119
      %p121 = pneg %p34
      %p122 = pneg %p31
      %p123 = pneg %p55
      %p124 = pneg %p52
      %p125 = pneg %p81
      %p126 = pneg %p78
      %p127 = scmp.lt.s32.totalorder %s13, 1
      %s128 = scalar_select %p127, %s13, 1
      %s129 = smul.addr %s128, 8
      %s130 = scalar_lea.vmem %s2, %s129
      %p131 = scmp.lt.s32.totalorder %s13, 1
      %s132 = scalar_select %p131, %s13, 1
      %s133 = smul.addr %s132, 8
      %s134 = scalar_lea.vmem %s0, %s133
      %p135 = scmp.lt.s32.totalorder %s13, 1
      %s136 = scalar_select %p135, %s13, 1
      %s137 = smul.addr %s136, 8
      %s138 = scalar_lea.vmem %s2, %s137
      %v139 = vld [vmem:[%s134] sm:$0xff]
      %v140 = vld [vmem:[%s1] sm:$0xff]
      %v141 = vadd.f32 %v139, %v140
      %vm142 = vcmask 261120
      %143 = vst.msk [vmem:[%s138] sm:$0xff] %vm142, %v141
      %p144 = scmp.lt.s32.totalorder %s13, 1
      %s145 = scalar_select %p144, %s13, 1
      %s146 = smul.addr %s145, 8
      %s147 = scalar_lea.vmem %s2, %s146
      // Predicated region
      $region29: #{encoder_layer_forward.7} parent=27 // pred_check
        %p148 = pneg %p78
      $region30: #{encoder_layer_forward.7} parent=27 // pred_check_branch
        %150 = sbr.rel (%p148) target = $region32
      $region31: #{encoder_layer_forward.7} parent=27 // pred_region
        _
      $region32: #{encoder_layer_forward.7} parent=27 // pred_fallthru
        _
    $region28: #{encoder_layer_forward.7} parent=5 // pred_fallthru
      _
    %p151 = scmp.le.s32.totalorder 2, %s8
    // Predicated region
    $region33: #{encoder_layer_forward.7} parent=5 // pred_check
      %p152 = pneg %p151
    $region34: #{encoder_layer_forward.7} parent=5 // pred_check_branch
      %154 = sbr.rel (%p152) target = $region36
    $region35: #{encoder_layer_forward.7} parent=5 // pred_region
      %s155 = ssub.s32 %s8, 2
      // Predicated region
      $region37: #{encoder_layer_forward.7} parent=35 // pred_check
        %p156 = pneg %p84
      $region38: #{encoder_layer_forward.7} parent=35 // pred_check_branch
        %158 = sbr.rel (%p156) target = $region40
      $region39: #{encoder_layer_forward.7} parent=35 // pred_region
        %p159 = scmp.lt.s32.totalorder %s14, 1
        %s160 = scalar_select %p159, %s14, 1
        %s161 = smul.addr %s160, 8
        %s162 = scalar_lea.vmem %s2, %s161
      $region40: #{encoder_layer_forward.7} parent=35 // pred_fallthru
        _
    $region36: #{encoder_layer_forward.7} parent=5 // pred_fallthru
      _
  $region6: #{encoder_layer_forward.7} parent=0 // loop_footer
    %s12 = sadd.s32 1, %s8
  $region7: #{encoder_layer_forward.7} parent=0 // loop_footer_branch
    %7 = sbr.rel target = $region3
  $region8: #{encoder_layer_forward.7} parent=0 // loop_exit
    _

// kernel: encoder_layer_forward.6
$region0: #{encoder_layer_forward.6}
  #allocation0 [shape = 'u32[]', space=smem, size = 0x4, offset = 0x4, fixed_abs, tag = 'smem constant byte address 0x4 - core index']
  #allocation1 [shape = 'u32[144,128]{1,0:T(1,128)}', space=vmem, size = 0x12000, scoped, tag = 'internal scratch']
  %s0 = inlined_call_operand.vmem [shape: f32[8,32], index: 0, kind: input, shape index: {}]
  %s1 = inlined_call_operand.vmem [shape: f32[1,32], index: 1, kind: input, shape index: {}]
  %s2 = inlined_call_operand.vmem [shape: f32[1,32], index: 2, kind: input, shape index: {}]
  %s3 = inlined_call_operand.vmem [shape: f32[32,64], index: 3, kind: input, shape index: {}]
  %s4 = inlined_call_operand.vmem [shape: f32[1,64], index: 4, kind: input, shape index: {}]
  %s5 = inlined_call_operand.vmem [shape: f32[64,32], index: 5, kind: input, shape index: {}]
  %s6 = inlined_call_operand.vmem [shape: f32[1,32], index: 6, kind: input, shape index: {}]
  %s7 = inlined_call_operand.vmem [shape: f32[8,32], index: 7, kind: output, shape index: {}]
  %s8 = sld [smem:[#allocation0]]
  $region38: #{encoder_layer_forward.6} parent=0
    _
  %s10 = ssub.s32 1, %s8
  %s11 = scalar_select 0, %s10, %s8
  // Predicated region
  $region2: #{encoder_layer_forward.6} parent=0 // pred_check
    _
  $region3: #{encoder_layer_forward.6} parent=0 // pred_check_branch
    %13 = sbr.rel (0) target = $region5
  $region4: #{encoder_layer_forward.6} parent=0 // pred_region
    _
  $region5: #{encoder_layer_forward.6} parent=0 // pred_fallthru
    _
  // Predicated region
  $region6: #{encoder_layer_forward.6} parent=0 // pred_check
    _
  $region7: #{encoder_layer_forward.6} parent=0 // pred_check_branch
    %15 = sbr.rel (0) target = $region9
  $region8: #{encoder_layer_forward.6} parent=0 // pred_region
    _
  $region9: #{encoder_layer_forward.6} parent=0 // pred_fallthru
    _
  // Predicated region
  $region10: #{encoder_layer_forward.6} parent=0 // pred_check
    _
  $region11: #{encoder_layer_forward.6} parent=0 // pred_check_branch
    %17 = sbr.rel (0) target = $region13
  $region12: #{encoder_layer_forward.6} parent=0 // pred_region
    _
  $region13: #{encoder_layer_forward.6} parent=0 // pred_fallthru
    _
  // Predicated region
  $region14: #{encoder_layer_forward.6} parent=0 // pred_check
    _
  $region15: #{encoder_layer_forward.6} parent=0 // pred_check_branch
    %19 = sbr.rel (0) target = $region17
  $region16: #{encoder_layer_forward.6} parent=0 // pred_region
    _
  $region17: #{encoder_layer_forward.6} parent=0 // pred_fallthru
    _
  // Predicated region
  $region18: #{encoder_layer_forward.6} parent=0 // pred_check
    _
  $region19: #{encoder_layer_forward.6} parent=0 // pred_check_branch
    %21 = sbr.rel (0) target = $region21
  $region20: #{encoder_layer_forward.6} parent=0 // pred_region
    _
  $region21: #{encoder_layer_forward.6} parent=0 // pred_fallthru
    _
  // Predicated region
  $region22: #{encoder_layer_forward.6} parent=0 // pred_check
    _
  $region23: #{encoder_layer_forward.6} parent=0 // pred_check_branch
    %23 = sbr.rel (0) target = $region25
  $region24: #{encoder_layer_forward.6} parent=0 // pred_region
    _
  $region25: #{encoder_layer_forward.6} parent=0 // pred_fallthru
    _
  // Predicated region
  $region26: #{encoder_layer_forward.6} parent=0 // pred_check
    _
  $region27: #{encoder_layer_forward.6} parent=0 // pred_check_branch
    %25 = sbr.rel (0) target = $region29
  $region28: #{encoder_layer_forward.6} parent=0 // pred_region
    _
  $region29: #{encoder_layer_forward.6} parent=0 // pred_fallthru
    _
  %v26 = vld [vmem:[%s0] sm:$0xff]
  %vm27 = vcmask 261120
  %v28 = vsel %vm27, %v26, 0.0
  %29 = vadd.xlane.f32.xlu0 %v28
  %v30 = vpop.xlane.xlu0 %29
  %v31 = vrcp.pop 32.0
  %v32 = vmul.f32 %v30, %v31
  %v33 = vsub.f32 %v26, %v32
  %v34 = vmul.f32 %v33, %v33
  %v35 = vsel %vm27, %v34, 0.0
  %36 = vadd.xlane.f32.xlu0 %v35
  %v37 = vpop.xlane.xlu0 %36
  %v38 = vrcp.pop 31.0
  %v39 = vmul.f32 %v37, %v38
  %v40 = vrsqrt.pop %v39
  %v41 = vmul.f32 %v39, %v40
  %vm42 = vcmp.eq.f32.partialorder %v39, inf
  %v43 = vsel %vm42, %v39, %v41
  %vm44 = vcmp.eq.f32.partialorder %v39, 0.0
  %v45 = vand.u32 %v39, 2147483648
  %v46 = vsel %vm44, %v45, %v43
  %v47 = vld [vmem:[%s1] sm:$0x1]
  %v49 = vlaneseq
  %v50 = vshrl.u32 %v49, 7
  %v51 = vsub.s32 0, %v50
  %v52 = vrot.slane %v47, %v51
  %v54 = vmul.f32 %v52, %v33
  %v55 = vadd.f32 %v46, 1e-06
  %v56 = vrcp.pop %v55
  %v57 = vmul.f32 %v54, %v56
  %v58 = vld [vmem:[%s2] sm:$0x1]
  %v60 = vlaneseq
  %v61 = vshrl.u32 %v60, 7
  %v62 = vsub.s32 0, %v61
  %v63 = vrot.slane %v58, %v62
  %v65 = vadd.f32 %v57, %v63
  %v66 = vld [vmem:[%s6] sm:$0x1]
  %v68 = vlaneseq
  %v69 = vshrl.u32 %v68, 7
  %v70 = vsub.s32 0, %v69
  %v71 = vrot.slane %v66, %v70
  %v73 = vadd.f32 %v71, 0.0
  %v74 = vld [vmem:[%s3] sm:$0xff]
  %v75 = vld [vmem:[%s3 + $0x8] sm:$0xff]
  %v76 = vld [vmem:[%s3 + $0x10] sm:$0xff]
  %v77 = vld [vmem:[%s3 + $0x18] sm:$0xff]
  %v78 = vld [vmem:[%s4] sm:$0x1]
  %v80 = vlaneseq
  %v81 = vshrl.u32 %v80, 7
  %v82 = vsub.s32 0, %v81
  %v83 = vrot.slane %v78, %v82
  %v86 = vsel %vm27, %v65, 0
  %88 = vmatprep.subr.mxu0 0.0
  %89 = vmatpush1.msra.mxu0 %v74
  %90 = vmatprep.subr.mxu0 0.0
  %91 = vmatpush1.msra.mxu0 %v75
  %92 = vmatprep.subr.mxu0 0.0
  %93 = vmatpush1.msra.mxu0 %v76
  %94 = vmatprep.subr.mxu0 0.0
  %95 = vmatpush1.msra.mxu0 %v77
  %96 = vmatprep.subr.mxu0 0.0
  %97 = vmatpush1.msra.mxu0 0.0
  %98 = vmatprep.subr.mxu0 0.0
  %99 = vmatpush1.msra.mxu0 0.0
  %100 = vmatprep.subr.mxu0 0.0
  %101 = vmatpush1.msra.mxu0 0.0
  %102 = vmatprep.subr.mxu0 0.0
  %103 = vmatpush1.msra.mxu0 0.0
  %104 = vmatprep.subr.mxu0 0.0
  %105 = vmatpush1.msra.mxu0 0.0
  %106 = vmatprep.subr.mxu0 0.0
  %107 = vmatpush1.msra.mxu0 0.0
  %108 = vmatprep.subr.mxu0 0.0
  %109 = vmatpush1.msra.mxu0 0.0
  %110 = vmatprep.subr.mxu0 0.0
  %111 = vmatpush1.msra.mxu0 0.0
  %112 = vmatprep.subr.mxu0 0.0
  %113 = vmatpush1.msra.mxu0 0.0
  %114 = vmatprep.subr.mxu0 0.0
  %115 = vmatpush1.msra.mxu0 0.0
  %116 = vmatprep.subr.mxu0 0.0
  %117 = vmatpush1.msra.mxu0 0.0
  %118 = vmatprep.subr.mxu0 0.0
  %119 = vmatpush1.msra.mxu0 0.0
  %120 = vmatprep.subr.mxu0 0.0
  %121 = vmatpush1.msra.mxu0 0.0
  %122 = vmatprep.subr.mxu0 0.0
  %123 = vmatpush1.msra.mxu0 0.0
  %124 = vmatprep.subr.mxu0 0.0
  %125 = vmatpush1.msra.mxu0 0.0
  %126 = vmatprep.subr.mxu0 0.0
  %127 = vmatpush1.msra.mxu0 0.0
  %128 = vmatprep.subr.mxu0 0.0
  %129 = vmatpush1.msra.mxu0 0.0
  %130 = vmatprep.subr.mxu0 0.0
  %131 = vmatpush1.msra.mxu0 0.0
  %132 = vmatprep.subr.mxu0 0.0
  %133 = vmatpush1.msra.mxu0 0.0
  %134 = vmatprep.subr.mxu0 0.0
  %135 = vmatpush1.msra.mxu0 0.0
  %136 = vmatprep.subr.mxu0 0.0
  %137 = vmatpush1.msra.mxu0 0.0
  %138 = vmatprep.subr.mxu0 0.0
  %139 = vmatpush1.msra.mxu0 0.0
  %140 = vmatprep.subr.mxu0 0.0
  %141 = vmatpush1.msra.mxu0 0.0
  %142 = vmatprep.subr.mxu0 0.0
  %143 = vmatpush1.msra.mxu0 0.0
  %144 = vmatprep.subr.mxu0 0.0
  %145 = vmatpush1.msra.mxu0 0.0
  %146 = vmatprep.subr.mxu0 0.0
  %147 = vmatpush1.msra.mxu0 0.0
  %148 = vmatprep.subr.mxu0 0.0
  %149 = vmatpush1.msra.mxu0 0.0
  %150 = vmatprep.subr.mxu0 0.0
  %151 = vmatpush1.msra.mxu0 0.0
  %152 = vmatprep.mubr.f32.mxu0 0.0
  %153 = vmatmul.mubr.f32.gmra.mrb[0].mxu0 %v86
  %v154 = vpop.f32.mrb[0].mxu0
  %v155 = vadd.f32 %v83, %v154
  %v156 = vpop.f32.mrb[0].mxu0
  %157 = vdwg.mxu0
  %v158 = vmax.f32 %v155, 0.0
  %v159 = vld [vmem:[%s5] sm:$0xff]
  %v160 = vld [vmem:[%s5 + $0x8] sm:$0xff]
  %v161 = vld [vmem:[%s5 + $0x10] sm:$0xff]
  %v162 = vld [vmem:[%s5 + $0x18] sm:$0xff]
  %v163 = vld [vmem:[%s5 + $0x20] sm:$0xff]
  %v164 = vld [vmem:[%s5 + $0x28] sm:$0xff]
  %v165 = vld [vmem:[%s5 + $0x30] sm:$0xff]
  %v166 = vld [vmem:[%s5 + $0x38] sm:$0xff]
  %vm167 = vcmask 523264
  %v169 = vsel %vm167, %v158, 0
  %171 = vmatprep.subr.mxu0 0.0
  %172 = vmatpush1.msra.mxu0 %v159
  %173 = vmatprep.subr.mxu0 0.0
  %174 = vmatpush1.msra.mxu0 %v160
  %175 = vmatprep.subr.mxu0 0.0
  %176 = vmatpush1.msra.mxu0 %v161
  %177 = vmatprep.subr.mxu0 0.0
  %178 = vmatpush1.msra.mxu0 %v162
  %179 = vmatprep.subr.mxu0 0.0
  %180 = vmatpush1.msra.mxu0 %v163
  %181 = vmatprep.subr.mxu0 0.0
  %182 = vmatpush1.msra.mxu0 %v164
  %183 = vmatprep.subr.mxu0 0.0
  %184 = vmatpush1.msra.mxu0 %v165
  %185 = vmatprep.subr.mxu0 0.0
  %186 = vmatpush1.msra.mxu0 %v166
  %187 = vmatprep.subr.mxu0 0.0
  %188 = vmatpush1.msra.mxu0 0.0
  %189 = vmatprep.subr.mxu0 0.0
  %190 = vmatpush1.msra.mxu0 0.0
  %191 = vmatprep.subr.mxu0 0.0
  %192 = vmatpush1.msra.mxu0 0.0
  %193 = vmatprep.subr.mxu0 0.0
  %194 = vmatpush1.msra.mxu0 0.0
  %195 = vmatprep.subr.mxu0 0.0
  %196 = vmatpush1.msra.mxu0 0.0
  %197 = vmatprep.subr.mxu0 0.0
  %198 = vmatpush1.msra.mxu0 0.0
  %199 = vmatprep.subr.mxu0 0.0
  %200 = vmatpush1.msra.mxu0 0.0
  %201 = vmatprep.subr.mxu0 0.0
  %202 = vmatpush1.msra.mxu0 0.0
  %203 = vmatprep.subr.mxu0 0.0
  %204 = vmatpush1.msra.mxu0 0.0
  %205 = vmatprep.subr.mxu0 0.0
  %206 = vmatpush1.msra.mxu0 0.0
  %207 = vmatprep.subr.mxu0 0.0
  %208 = vmatpush1.msra.mxu0 0.0
  %209 = vmatprep.subr.mxu0 0.0
  %210 = vmatpush1.msra.mxu0 0.0
  %211 = vmatprep.subr.mxu0 0.0
  %212 = vmatpush1.msra.mxu0 0.0
  %213 = vmatprep.subr.mxu0 0.0
  %214 = vmatpush1.msra.mxu0 0.0
  %215 = vmatprep.subr.mxu0 0.0
  %216 = vmatpush1.msra.mxu0 0.0
  %217 = vmatprep.subr.mxu0 0.0
  %218 = vmatpush1.msra.mxu0 0.0
  %219 = vmatprep.subr.mxu0 0.0
  %220 = vmatpush1.msra.mxu0 0.0
  %221 = vmatprep.subr.mxu0 0.0
  %222 = vmatpush1.msra.mxu0 0.0
  %223 = vmatprep.subr.mxu0 0.0
  %224 = vmatpush1.msra.mxu0 0.0
  %225 = vmatprep.subr.mxu0 0.0
  %226 = vmatpush1.msra.mxu0 0.0
  %227 = vmatprep.subr.mxu0 0.0
  %228 = vmatpush1.msra.mxu0 0.0
  %229 = vmatprep.subr.mxu0 0.0
  %230 = vmatpush1.msra.mxu0 0.0
  %231 = vmatprep.subr.mxu0 0.0
  %232 = vmatpush1.msra.mxu0 0.0
  %233 = vmatprep.subr.mxu0 0.0
  %234 = vmatpush1.msra.mxu0 0.0
  %235 = vmatprep.mubr.f32.mxu0 0.0
  %236 = vmatmul.mubr.f32.gmra.mrb[0].mxu0 %v169
  %v237 = vpop.f32.mrb[0].mxu0
  %v238 = vadd.f32 0.0, %v237
  %v239 = vpop.f32.mrb[0].mxu0
  %240 = vdwg.mxu0
  %v241 = vadd.f32 %v73, %v238
  %242 = vst.msk [vmem:[%s7] sm:$0xff] %vm27, %v241
  // Predicated region
  $region30: #{encoder_layer_forward.6} parent=0 // pred_check
    _
  $region31: #{encoder_layer_forward.6} parent=0 // pred_check_branch
    %244 = sbr.rel (0) target = $region33
  $region32: #{encoder_layer_forward.6} parent=0 // pred_region
    _
  $region33: #{encoder_layer_forward.6} parent=0 // pred_fallthru
    _
  // Predicated region
  $region34: #{encoder_layer_forward.6} parent=0 // pred_check
    _
  $region35: #{encoder_layer_forward.6} parent=0 // pred_check_branch
    %246 = sbr.rel (0) target = $region37
  $region36: #{encoder_layer_forward.6} parent=0 // pred_region
    _
  $region37: #{encoder_layer_forward.6} parent=0 // pred_fallthru
    _

// kernel: encoder_layer_forward.5
$region0: #{encoder_layer_forward.5}
  #allocation0 [shape = 'u32[]', space=smem, size = 0x4, offset = 0x4, fixed_abs, tag = 'smem constant byte address 0x4 - core index']
  #allocation1 [shape = 'u32[144,128]{1,0:T(1,128)}', space=vmem, size = 0x12000, scoped, tag = 'internal scratch']
  #allocation2 [shape = 'f32[8,32]{1,0:T(8,128)}', space=vmem, size = 0x1000, scoped, tag = 'scratch operand']
  %s0 = inlined_call_operand.vmem [shape: f32[2,8,32], index: 0, kind: input, shape index: {}]
  %s1 = inlined_call_operand.vmem [shape: f32[2,8,32], index: 1, kind: input, shape index: {}]
  %s2 = inlined_call_operand.vmem [shape: f32[2,8,32], index: 2, kind: input, shape index: {}]
  %s3 = inlined_call_operand.vmem [shape: f32[2,1,8], index: 3, kind: input, shape index: {}]
  %s4 = inlined_call_operand.vmem [shape: f32[2,8,32], index: 4, kind: input, shape index: {}]
  %s5 = inlined_call_operand.vmem [shape: f32[32,32], index: 5, kind: input, shape index: {}]
  %s6 = inlined_call_operand.vmem [shape: f32[1,32], index: 6, kind: input, shape index: {}]
  %s7 = inlined_call_operand.vmem [shape: f32[2,8,32], index: 7, kind: output, shape index: {0}]
  %s8 = inlined_call_operand.hbm [shape: f32[2,4,8,8], index: 8, kind: output, shape index: {1}]
  %9 = xla_tuple %s7, %s8
  %s10 = sld [smem:[#allocation0]]
  $region69: #{encoder_layer_forward.5} parent=0
    _
  %s12 = ssub.s32 1, %s10
  %s13 = scalar_select 0, %s12, %s10
  $region1: #{encoder_layer_forward.5} parent=0
    #allocation3 [shape = 'u8[32768]{0}', space=vmem, size = 0x8000, scoped, tag = 'output window, operand 1']
    #allocation4 [shape = 's32[2]{0}', space=sflag, size = 0x8, scoped, tag = 'scoped memory for encoder_layer_forward.5']
    %14 = vsyncpa [#allocation4], 0
    %s15 = scalar_lea.sflag [#allocation4], 1
    %16 = vsyncpa %s15, 0
    loop: start=0, step=1, limit=4
    $region2: #{encoder_layer_forward.5} parent=1 // loop_pre_header
      _
    $region3: #{encoder_layer_forward.5} parent=1 // loop_header
      %s18 = sphi 0, %s22
      %p19 = scmp.ge.s32.totalorder %s18, 4
      %s28 = sphi 0, %s30
      %s31 = sphi 0, %s28
      %s32 = sphi 0, %s31
      %s48 = sphi 0, %s32
      %s54 = sphi 0, %s56
      %s57 = sphi 0, %s54
      %s58 = sphi 0, %s57
      %s74 = sphi 0, %s58
      %s80 = sphi 0, %s82
      %s83 = sphi 0, %s80
      %s84 = sphi 0, %s83
      %s100 = sphi 0, %s84
      %s106 = sphi 0, %s108
      %s109 = sphi 0, %s106
      %s110 = sphi 0, %s109
      %s126 = sphi 0, %s110
      %s132 = sphi 0, %s134
      %s135 = sphi 0, %s132
      %s136 = sphi 0, %s135
      %s152 = sphi 0, %s136
      %s156 = sphi 0, %s156
      %s158 = sphi 0, %s156
      %s159 = sphi 0, %s158
      %s173 = sphi 0, %s159
      %s177 = sphi 0, %s177
      %s179 = sphi 0, %s177
      %s180 = sphi 0, %s179
      %s194 = sphi 0, %s180
      %s200 = sphi 0, %s202
      %s203 = sphi 0, %s200
      %s204 = sphi 0, %s203
      %s220 = sphi 0, %s204
      %s226 = sphi 0, %s228
      %s229 = sphi 0, %s226
      %s230 = sphi 0, %s229
      %s246 = sphi 0, %s230
    $region4: #{encoder_layer_forward.5} parent=1 // loop_header_branch
      %21 = sbr.rel (%p19) target = $region8
    $region5: #{encoder_layer_forward.5} parent=1 // loop_body
      %s23 = ssub.s32 %s18, 1
      %s24 = ssub.s32 %s18, 2
      %s25 = sadd.s32 %s18, 1
      %s26 = ssub.s32 %s18, %s25
      %p27 = scmp.eq.s32.totalorder %s26, 0
      %s29 = sadd.s32 %s28, 1
      %s30 = scalar_select %p27, %s28, %s29
      %p33 = pneg %p27
      %p34 = scmp.eq.s32.totalorder %s18, 1
      %p35 = por %p33, %p34
      %p36 = scmp.ne.s32.totalorder %s28, %s31
      %p37 = scmp.eq.s32.totalorder %s18, 0
      %p38 = por %p36, %p37
      %p39 = scmp.ne.s32.totalorder %s28, %s31
      %p40 = scmp.eq.s32.totalorder %s23, 1
      %p41 = por %p39, %p40
      %p42 = scmp.ne.s32.totalorder %s31, %s32
      %p43 = scmp.eq.s32.totalorder %s23, 0
      %p44 = por %p42, %p43
      %p45 = scmp.ne.s32.totalorder %s31, %s32
      %p46 = scmp.eq.s32.totalorder %s24, 1
      %p47 = por %p45, %p46
      %p49 = scmp.ne.s32.totalorder %s32, %s48
      %p50 = scmp.eq.s32.totalorder %s24, 0
      %p51 = por %p49, %p50
      %s52 = ssub.s32 %s18, %s25
      %p53 = scmp.eq.s32.totalorder %s52, 0
      %s55 = sadd.s32 %s54, 1
      %s56 = scalar_select %p53, %s54, %s55
      %p59 = pneg %p53
      %p60 = scmp.eq.s32.totalorder %s18, 1
      %p61 = por %p59, %p60
      %p62 = scmp.ne.s32.totalorder %s54, %s57
      %p63 = scmp.eq.s32.totalorder %s18, 0
      %p64 = por %p62, %p63
      %p65 = scmp.ne.s32.totalorder %s54, %s57
      %p66 = scmp.eq.s32.totalorder %s23, 1
      %p67 = por %p65, %p66
      %p68 = scmp.ne.s32.totalorder %s57, %s58
      %p69 = scmp.eq.s32.totalorder %s23, 0
      %p70 = por %p68, %p69
      %p71 = scmp.ne.s32.totalorder %s57, %s58
      %p72 = scmp.eq.s32.totalorder %s24, 1
      %p73 = por %p71, %p72
      %p75 = scmp.ne.s32.totalorder %s58, %s74
      %p76 = scmp.eq.s32.totalorder %s24, 0
      %p77 = por %p75, %p76
      %s78 = ssub.s32 %s18, %s25
      %p79 = scmp.eq.s32.totalorder %s78, 0
      %s81 = sadd.s32 %s80, 1
      %s82 = scalar_select %p79, %s80, %s81
      %p85 = pneg %p79
      %p86 = scmp.eq.s32.totalorder %s18, 1
      %p87 = por %p85, %p86
      %p88 = scmp.ne.s32.totalorder %s80, %s83
      %p89 = scmp.eq.s32.totalorder %s18, 0
      %p90 = por %p88, %p89
      %p91 = scmp.ne.s32.totalorder %s80, %s83
      %p92 = scmp.eq.s32.totalorder %s23, 1
      %p93 = por %p91, %p92
      %p94 = scmp.ne.s32.totalorder %s83, %s84
      %p95 = scmp.eq.s32.totalorder %s23, 0
      %p96 = por %p94, %p95
      %p97 = scmp.ne.s32.totalorder %s83, %s84
      %p98 = scmp.eq.s32.totalorder %s24, 1
      %p99 = por %p97, %p98
      %p101 = scmp.ne.s32.totalorder %s84, %s100
      %p102 = scmp.eq.s32.totalorder %s24, 0
      %p103 = por %p101, %p102
      %s104 = ssub.s32 %s18, %s25
      %p105 = scmp.eq.s32.totalorder %s104, 0
      %s107 = sadd.s32 %s106, 1
      %s108 = scalar_select %p105, %s106, %s107
      %p111 = pneg %p105
      %p112 = scmp.eq.s32.totalorder %s18, 1
      %p113 = por %p111, %p112
      %p114 = scmp.ne.s32.totalorder %s106, %s109
      %p115 = scmp.eq.s32.totalorder %s18, 0
      %p116 = por %p114, %p115
      %p117 = scmp.ne.s32.totalorder %s106, %s109
      %p118 = scmp.eq.s32.totalorder %s23, 1
      %p119 = por %p117, %p118
      %p120 = scmp.ne.s32.totalorder %s109, %s110
      %p121 = scmp.eq.s32.totalorder %s23, 0
      %p122 = por %p120, %p121
      %p123 = scmp.ne.s32.totalorder %s109, %s110
      %p124 = scmp.eq.s32.totalorder %s24, 1
      %p125 = por %p123, %p124
      %p127 = scmp.ne.s32.totalorder %s110, %s126
      %p128 = scmp.eq.s32.totalorder %s24, 0
      %p129 = por %p127, %p128
      %s130 = ssub.s32 %s18, %s25
      %p131 = scmp.eq.s32.totalorder %s130, 0
      %s133 = sadd.s32 %s132, 1
      %s134 = scalar_select %p131, %s132, %s133
      %p137 = pneg %p131
      %p138 = scmp.eq.s32.totalorder %s18, 1
      %p139 = por %p137, %p138
      %p140 = scmp.ne.s32.totalorder %s132, %s135
      %p141 = scmp.eq.s32.totalorder %s18, 0
      %p142 = por %p140, %p141
      %p143 = scmp.ne.s32.totalorder %s132, %s135
      %p144 = scmp.eq.s32.totalorder %s23, 1
      %p145 = por %p143, %p144
      %p146 = scmp.ne.s32.totalorder %s135, %s136
      %p147 = scmp.eq.s32.totalorder %s23, 0
      %p148 = por %p146, %p147
      %p149 = scmp.ne.s32.totalorder %s135, %s136
      %p150 = scmp.eq.s32.totalorder %s24, 1
      %p151 = por %p149, %p150
      %p153 = scmp.ne.s32.totalorder %s136, %s152
      %p154 = scmp.eq.s32.totalorder %s24, 0
      %p155 = por %p153, %p154
      %s157 = sadd.s32 %s156, 1
      %p160 = scmp.eq.s32.totalorder %s18, 1
      %p161 = scmp.ne.s32.totalorder %s156, %s158
      %p162 = scmp.eq.s32.totalorder %s18, 0
      %p163 = por %p161, %p162
      %p164 = scmp.ne.s32.totalorder %s156, %s158
      %p165 = scmp.eq.s32.totalorder %s23, 1
      %p166 = por %p164, %p165
      %p167 = scmp.ne.s32.totalorder %s158, %s159
      %p168 = scmp.eq.s32.totalorder %s23, 0
      %p169 = por %p167, %p168
      %p170 = scmp.ne.s32.totalorder %s158, %s159
      %p171 = scmp.eq.s32.totalorder %s24, 1
      %p172 = por %p170, %p171
      %p174 = scmp.ne.s32.totalorder %s159, %s173
      %p175 = scmp.eq.s32.totalorder %s24, 0
      %p176 = por %p174, %p175
      %s178 = sadd.s32 %s177, 1
      %p181 = scmp.eq.s32.totalorder %s18, 1
      %p182 = scmp.ne.s32.totalorder %s177, %s179
      %p183 = scmp.eq.s32.totalorder %s18, 0
      %p184 = por %p182, %p183
      %p185 = scmp.ne.s32.totalorder %s177, %s179
      %p186 = scmp.eq.s32.totalorder %s23, 1
      %p187 = por %p185, %p186
      %p188 = scmp.ne.s32.totalorder %s179, %s180
      %p189 = scmp.eq.s32.totalorder %s23, 0
      %p190 = por %p188, %p189
      %p191 = scmp.ne.s32.totalorder %s179, %s180
      %p192 = scmp.eq.s32.totalorder %s24, 1
      %p193 = por %p191, %p192
      %p195 = scmp.ne.s32.totalorder %s180, %s194
      %p196 = scmp.eq.s32.totalorder %s24, 0
      %p197 = por %p195, %p196
      %s198 = ssub.s32 %s18, %s25
      %p199 = scmp.eq.s32.totalorder %s198, 0
      %s201 = sadd.s32 %s200, 1
      %s202 = scalar_select %p199, %s200, %s201
      %p205 = pneg %p199
      %p206 = scmp.eq.s32.totalorder %s18, 1
      %p207 = por %p205, %p206
      %p208 = scmp.ne.s32.totalorder %s200, %s203
      %p209 = scmp.eq.s32.totalorder %s18, 0
      %p210 = por %p208, %p209
      %p211 = scmp.ne.s32.totalorder %s200, %s203
      %p212 = scmp.eq.s32.totalorder %s23, 1
      %p213 = por %p211, %p212
      %p214 = scmp.ne.s32.totalorder %s203, %s204
      %p215 = scmp.eq.s32.totalorder %s23, 0
      %p216 = por %p214, %p215
      %p217 = scmp.ne.s32.totalorder %s203, %s204
      %p218 = scmp.eq.s32.totalorder %s24, 1
      %p219 = por %p217, %p218
      %p221 = scmp.ne.s32.totalorder %s204, %s220
      %p222 = scmp.eq.s32.totalorder %s24, 0
      %p223 = por %p221, %p222
      %s224 = ssub.s32 %s18, %s25
      %p225 = scmp.eq.s32.totalorder %s224, 0
      %s227 = sadd.s32 %s226, 1
      %s228 = scalar_select %p225, %s226, %s227
      %p231 = pneg %p225
      %p232 = scmp.eq.s32.totalorder %s18, 1
      %p233 = por %p231, %p232
      %p234 = scmp.ne.s32.totalorder %s226, %s229
      %p235 = scmp.eq.s32.totalorder %s18, 0
      %p236 = por %p234, %p235
      %p237 = scmp.ne.s32.totalorder %s226, %s229
      %p238 = scmp.eq.s32.totalorder %s23, 1
      %p239 = por %p237, %p238
      %p240 = scmp.ne.s32.totalorder %s229, %s230
      %p241 = scmp.eq.s32.totalorder %s23, 0
      %p242 = por %p240, %p241
      %p243 = scmp.ne.s32.totalorder %s229, %s230
      %p244 = scmp.eq.s32.totalorder %s24, 1
      %p245 = por %p243, %p244
      %p247 = scmp.ne.s32.totalorder %s230, %s246
      %p248 = scmp.eq.s32.totalorder %s24, 0
      %p249 = por %p247, %p248
      %p250 = scmp.le.s32.totalorder 1, %s18
      %p251 = scmp.lt.s32.totalorder %s18, 3
      %p252 = pnand %p250, %p251
      %p253 = pneg %p252
      // Predicated region
      $region9: #{encoder_layer_forward.5} parent=5 // pred_check
        _
      $region10: #{encoder_layer_forward.5} parent=5 // pred_check_branch
        %255 = sbr.rel (%p252) target = $region12
      $region11: #{encoder_layer_forward.5} parent=5 // pred_region
        %s256 = ssub.s32 %s18, 1
        // Predicated region
        $region13: #{encoder_layer_forward.5} parent=11 // pred_check
          %p257 = pneg %p169
        $region14: #{encoder_layer_forward.5} parent=11 // pred_check_branch
          %259 = sbr.rel (%p257) target = $region16
        $region15: #{encoder_layer_forward.5} parent=11 // pred_region
          _
        $region16: #{encoder_layer_forward.5} parent=11 // pred_fallthru
          _
        // Predicated region
        $region17: #{encoder_layer_forward.5} parent=11 // pred_check
          %p260 = pneg %p190
        $region18: #{encoder_layer_forward.5} parent=11 // pred_check_branch
          %262 = sbr.rel (%p260) target = $region20
        $region19: #{encoder_layer_forward.5} parent=11 // pred_region
          _
        $region20: #{encoder_layer_forward.5} parent=11 // pred_fallthru
          _
      $region12: #{encoder_layer_forward.5} parent=5 // pred_fallthru
        _
      %p263 = scmp.lt.s32.totalorder %s18, 2
      // Predicated region
      $region21: #{encoder_layer_forward.5} parent=5 // pred_check
        %p264 = pneg %p263
      $region22: #{encoder_layer_forward.5} parent=5 // pred_check_branch
        %266 = sbr.rel (%p264) target = $region24
      $region23: #{encoder_layer_forward.5} parent=5 // pred_region
        // Predicated region
        $region25: #{encoder_layer_forward.5} parent=23 // pred_check
          %p267 = pneg %p38
        $region26: #{encoder_layer_forward.5} parent=23 // pred_check_branch
          %269 = sbr.rel (%p267) target = $region28
        $region27: #{encoder_layer_forward.5} parent=23 // pred_region
          %p270 = scmp.lt.s32.totalorder %s18, 1
          %s271 = scalar_select %p270, %s18, 1
          %s272 = smul.addr %s271, 8
          %s273 = scalar_lea.vmem %s0, %s272
        $region28: #{encoder_layer_forward.5} parent=23 // pred_fallthru
          _
        // Predicated region
        $region29: #{encoder_layer_forward.5} parent=23 // pred_check
          %p274 = pneg %p64
        $region30: #{encoder_layer_forward.5} parent=23 // pred_check_branch
          %276 = sbr.rel (%p274) target = $region32
        $region31: #{encoder_layer_forward.5} parent=23 // pred_region
          %p277 = scmp.lt.s32.totalorder %s18, 1
          %s278 = scalar_select %p277, %s18, 1
          %s279 = smul.addr %s278, 8
          %s280 = scalar_lea.vmem %s1, %s279
        $region32: #{encoder_layer_forward.5} parent=23 // pred_fallthru
          _
        // Predicated region
        $region33: #{encoder_layer_forward.5} parent=23 // pred_check
          %p281 = pneg %p90
        $region34: #{encoder_layer_forward.5} parent=23 // pred_check_branch
          %283 = sbr.rel (%p281) target = $region36
        $region35: #{encoder_layer_forward.5} parent=23 // pred_region
          %p284 = scmp.lt.s32.totalorder %s18, 1
          %s285 = scalar_select %p284, %s18, 1
          %s286 = smul.addr %s285, 8
          %s287 = scalar_lea.vmem %s2, %s286
        $region36: #{encoder_layer_forward.5} parent=23 // pred_fallthru
          _
        // Predicated region
        $region37: #{encoder_layer_forward.5} parent=23 // pred_check
          %p288 = pneg %p116
        $region38: #{encoder_layer_forward.5} parent=23 // pred_check_branch
          %290 = sbr.rel (%p288) target = $region40
        $region39: #{encoder_layer_forward.5} parent=23 // pred_region
          %p291 = scmp.lt.s32.totalorder %s18, 1
          %s292 = scalar_select %p291, %s18, 1
          %s293 = scalar_lea.vmem %s3, %s292
        $region40: #{encoder_layer_forward.5} parent=23 // pred_fallthru
          _
        // Predicated region
        $region41: #{encoder_layer_forward.5} parent=23 // pred_check
          %p294 = pneg %p142
        $region42: #{encoder_layer_forward.5} parent=23 // pred_check_branch
          %296 = sbr.rel (%p294) target = $region44
        $region43: #{encoder_layer_forward.5} parent=23 // pred_region
          %p297 = scmp.lt.s32.totalorder %s18, 1
          %s298 = scalar_select %p297, %s18, 1
          %s299 = smul.addr %s298, 8
          %s300 = scalar_lea.vmem %s4, %s299
        $region44: #{encoder_layer_forward.5} parent=23 // pred_fallthru
          _
      $region24: #{encoder_layer_forward.5} parent=5 // pred_fallthru
        _
      %p301 = scmp.le.s32.totalorder 1, %s18
      %p302 = scmp.lt.s32.totalorder %s18, 3
      %p303 = pnand %p301, %p302
      %p304 = pneg %p303
      // Predicated region
      $region45: #{encoder_layer_forward.5} parent=5 // pred_check
        _
      $region46: #{encoder_layer_forward.5} parent=5 // pred_check_branch
        %306 = sbr.rel (%p303) target = $region48
      $region47: #{encoder_layer_forward.5} parent=5 // pred_region
        %s307 = ssub.s32 %s18, 1
        %p308 = scmp.lt.s32.totalorder %s23, 1
        %s309 = scalar_select %p308, %s23, 1
        %s310 = smul.addr %s309, 8
        %s311 = scalar_lea.vmem %s0, %s310
        %p312 = pneg %p44
        %p313 = pneg %p41
        %p314 = scmp.lt.s32.totalorder %s23, 1
        %s315 = scalar_select %p314, %s23, 1
        %s316 = smul.addr %s315, 8
        %s317 = scalar_lea.vmem %s1, %s316
        %p318 = pneg %p70
        %p319 = pneg %p67
        %p320 = scmp.lt.s32.totalorder %s23, 1
        %s321 = scalar_select %p320, %s23, 1
        %s322 = smul.addr %s321, 8
        %s323 = scalar_lea.vmem %s2, %s322
        %p324 = pneg %p96
        %p325 = pneg %p93
        %p326 = scmp.lt.s32.totalorder %s23, 1
        %s327 = scalar_select %p326, %s23, 1
        %s328 = scalar_lea.vmem %s3, %s327
        %p329 = pneg %p122
        %p330 = pneg %p119
        %p331 = scmp.lt.s32.totalorder %s23, 1
        %s332 = scalar_select %p331, %s23, 1
        %s333 = smul.addr %s332, 8
        %s334 = scalar_lea.vmem %s4, %s333
        %p335 = pneg %p148
        %p336 = pneg %p145
        %p337 = pneg %p169
        %p338 = pneg %p166
        %p339 = pneg %p190
        %p340 = pneg %p187
        %p341 = pneg %p216
        %p342 = pneg %p213
        %p343 = scmp.lt.s32.totalorder %s23, 1
        %s344 = scalar_select %p343, %s23, 1
        %s345 = smul.addr %s344, 8
        %s346 = scalar_lea.vmem %s7, %s345
        %p347 = pneg %p242
        %p348 = pneg %p239
        %s349 = sand.u32 %s229, 1
        %s350 = scalar_lea.sflag [#allocation4], %s349
        %s351 = sand.u32 %s229, 1
        %s352 = smul.addr %s351, 32
        %s353 = scalar_lea.vmem [#allocation3], %s352
        %p354 = scmp.lt.s32.totalorder %s23, 1
        %s355 = scalar_select %p354, %s23, 1
        %s356 = smul.addr %s355, 8
        %s357 = scalar_lea.vmem %s0, %s356
        %p358 = scmp.lt.s32.totalorder %s23, 1
        %s359 = scalar_select %p358, %s23, 1
        %s360 = smul.addr %s359, 8
        %s361 = scalar_lea.vmem %s1, %s360
        %p362 = scmp.lt.s32.totalorder %s23, 1
        %s363 = scalar_select %p362, %s23, 1
        %s364 = smul.addr %s363, 8
        %s365 = scalar_lea.vmem %s2, %s364
        %p366 = scmp.lt.s32.totalorder %s23, 1
        %s367 = scalar_select %p366, %s23, 1
        %s368 = scalar_lea.vmem %s3, %s367
        %p369 = scmp.lt.s32.totalorder %s23, 1
        %s370 = scalar_select %p369, %s23, 1
        %s371 = smul.addr %s370, 8
        %s372 = scalar_lea.vmem %s4, %s371
        %p373 = scmp.lt.s32.totalorder %s23, 1
        %s374 = scalar_select %p373, %s23, 1
        %s375 = smul.addr %s374, 8
        %s376 = scalar_lea.vmem %s7, %s375
        %v377 = vld [vmem:[%s357] sm:$0xff]
        %v378 = vld [vmem:[%s361] sm:$0xff]
        %v379 = vld [vmem:[%s365] sm:$0xff]
        %v380 = vld [vmem:[%s368] sm:$0x1]
        %vm381 = vcmp.eq.f32.partialorder %v380, 0.0
        %v382 = vsel %vm381, -1e+09, 0.0
        %vm383 = vcmask 64512
        %v385 = vsel %vm383, %v377, 0
        %v388 = vsel %vm383, %v378, 0
        %390 = vmatprep.subr.mxu0 0.0
        %391 = vmatpush1.xpose.msra.mxu0 %v388
        %392 = vmatprep.subr.mxu0 0.0
        %393 = vmatpush1.xpose.msra.mxu0 0.0
        %394 = vmatprep.subr.mxu0 0.0
        %395 = vmatpush1.xpose.msra.mxu0 0.0
        %396 = vmatprep.subr.mxu0 0.0
        %397 = vmatpush1.xpose.msra.mxu0 0.0
        %398 = vmatprep.subr.mxu0 0.0
        %399 = vmatpush1.xpose.msra.mxu0 0.0
        %400 = vmatprep.subr.mxu0 0.0
        %401 = vmatpush1.xpose.msra.mxu0 0.0
        %402 = vmatprep.subr.mxu0 0.0
        %403 = vmatpush1.xpose.msra.mxu0 0.0
        %404 = vmatprep.subr.mxu0 0.0
        %405 = vmatpush1.xpose.msra.mxu0 0.0
        %406 = vmatprep.subr.mxu0 0.0
        %407 = vmatpush1.xpose.msra.mxu0 0.0
        %408 = vmatprep.subr.mxu0 0.0
        %409 = vmatpush1.xpose.msra.mxu0 0.0
        %410 = vmatprep.subr.mxu0 0.0
        %411 = vmatpush1.xpose.msra.mxu0 0.0
        %412 = vmatprep.subr.mxu0 0.0
        %413 = vmatpush1.xpose.msra.mxu0 0.0
        %414 = vmatprep.subr.mxu0 0.0
        %415 = vmatpush1.xpose.msra.mxu0 0.0
        %416 = vmatprep.subr.mxu0 0.0
        %417 = vmatpush1.xpose.msra.mxu0 0.0
        %418 = vmatprep.subr.mxu0 0.0
        %419 = vmatpush1.xpose.msra.mxu0 0.0
        %420 = vmatprep.subr.mxu0 0.0
        %421 = vmatpush1.xpose.msra.mxu0 0.0
        %422 = vmatprep.subr.mxu0 0.0
        %423 = vmatpush1.xpose.msra.mxu0 0.0
        %424 = vmatprep.subr.mxu0 0.0
        %425 = vmatpush1.xpose.msra.mxu0 0.0
        %426 = vmatprep.subr.mxu0 0.0
        %427 = vmatpush1.xpose.msra.mxu0 0.0
        %428 = vmatprep.subr.mxu0 0.0
        %429 = vmatpush1.xpose.msra.mxu0 0.0
        %430 = vmatprep.subr.mxu0 0.0
        %431 = vmatpush1.xpose.msra.mxu0 0.0
        %432 = vmatprep.subr.mxu0 0.0
        %433 = vmatpush1.xpose.msra.mxu0 0.0
        %434 = vmatprep.subr.mxu0 0.0
        %435 = vmatpush1.xpose.msra.mxu0 0.0
        %436 = vmatprep.subr.mxu0 0.0
        %437 = vmatpush1.xpose.msra.mxu0 0.0
        %438 = vmatprep.subr.mxu0 0.0
        %439 = vmatpush1.xpose.msra.mxu0 0.0
        %440 = vmatprep.subr.mxu0 0.0
        %441 = vmatpush1.xpose.msra.mxu0 0.0
        %442 = vmatprep.subr.mxu0 0.0
        %443 = vmatpush1.xpose.msra.mxu0 0.0
        %444 = vmatprep.subr.mxu0 0.0
        %445 = vmatpush1.xpose.msra.mxu0 0.0
        %446 = vmatprep.subr.mxu0 0.0
        %447 = vmatpush1.xpose.msra.mxu0 0.0
        %448 = vmatprep.subr.mxu0 0.0
        %449 = vmatpush1.xpose.msra.mxu0 0.0
        %450 = vmatprep.subr.mxu0 0.0
        %451 = vmatpush1.xpose.msra.mxu0 0.0
        %452 = vmatprep.subr.mxu0 0.0
        %453 = vmatpush1.xpose.msra.mxu0 0.0
        %454 = vmatprep.mubr.f32.mxu0 0.0
        %455 = vmatmul.mubr.f32.gmra.mrb[0].mxu0 %v385
        %v456 = vpop.f32.mrb[0].mxu0
        %v457 = vadd.f32 0.0, %v456
        %v458 = vpop.f32.mrb[0].mxu0
        %459 = vdwg.mxu0
        %v460 = vmul.f32 %v457, 0.35355338
        %v462 = vlaneseq
        %v463 = vshrl.u32 %v462, 7
        %v464 = vsub.s32 0, %v463
        %v465 = vrot.slane %v382, %v464
        %v467 = vadd.f32 %v460, %v465
        %v468 = vsel %vm383, %v467, -inf
        %469 = vmax.xlane.f32.xlu0 %v468
        %v470 = vpop.xlane.xlu0 %469
        %v471 = vsub.f32 %v467, %v470
        %v472 = vmul.f32 %v471, 1.442695
        %v473 = vpow.pop %v472
        %v474 = vsel %vm383, %v473, 0.0
        %475 = vadd.xlane.f32.xlu0 %v474
        %v476 = vpop.xlane.xlu0 %475
        %v477 = vrcp.pop %v476
        %v478 = vmul.f32 %v473, %v477
        %479 = vst.msk [vmem:[%s353] sm:$0xff] %vm383, %v478
        %v481 = vsel %vm383, %v478, 0
        %483 = vmatprep.subr.mxu0 0.0
        %484 = vmatpush1.msra.mxu0 %v379
        %485 = vmatprep.subr.mxu0 0.0
        %486 = vmatpush1.msra.mxu0 0.0
        %487 = vmatprep.subr.mxu0 0.0
        %488 = vmatpush1.msra.mxu0 0.0
        %489 = vmatprep.subr.mxu0 0.0
        %490 = vmatpush1.msra.mxu0 0.0
        %491 = vmatprep.subr.mxu0 0.0
        %492 = vmatpush1.msra.mxu0 0.0
        %493 = vmatprep.subr.mxu0 0.0
        %494 = vmatpush1.msra.mxu0 0.0
        %495 = vmatprep.subr.mxu0 0.0
        %496 = vmatpush1.msra.mxu0 0.0
        %497 = vmatprep.subr.mxu0 0.0
        %498 = vmatpush1.msra.mxu0 0.0
        %499 = vmatprep.subr.mxu0 0.0
        %500 = vmatpush1.msra.mxu0 0.0
        %501 = vmatprep.subr.mxu0 0.0
        %502 = vmatpush1.msra.mxu0 0.0
        %503 = vmatprep.subr.mxu0 0.0
        %504 = vmatpush1.msra.mxu0 0.0
        %505 = vmatprep.subr.mxu0 0.0
        %506 = vmatpush1.msra.mxu0 0.0
        %507 = vmatprep.subr.mxu0 0.0
        %508 = vmatpush1.msra.mxu0 0.0
        %509 = vmatprep.subr.mxu0 0.0
        %510 = vmatpush1.msra.mxu0 0.0
        %511 = vmatprep.subr.mxu0 0.0
        %512 = vmatpush1.msra.mxu0 0.0
        %513 = vmatprep.subr.mxu0 0.0
        %514 = vmatpush1.msra.mxu0 0.0
        %515 = vmatprep.subr.mxu0 0.0
        %516 = vmatpush1.msra.mxu0 0.0
        %517 = vmatprep.subr.mxu0 0.0
        %518 = vmatpush1.msra.mxu0 0.0
        %519 = vmatprep.subr.mxu0 0.0
        %520 = vmatpush1.msra.mxu0 0.0
        %521 = vmatprep.subr.mxu0 0.0
        %522 = vmatpush1.msra.mxu0 0.0
        %523 = vmatprep.subr.mxu0 0.0
        %524 = vmatpush1.msra.mxu0 0.0
        %525 = vmatprep.subr.mxu0 0.0
        %526 = vmatpush1.msra.mxu0 0.0
        %527 = vmatprep.subr.mxu0 0.0
        %528 = vmatpush1.msra.mxu0 0.0
        %529 = vmatprep.subr.mxu0 0.0
        %530 = vmatpush1.msra.mxu0 0.0
        %531 = vmatprep.subr.mxu0 0.0
        %532 = vmatpush1.msra.mxu0 0.0
        %533 = vmatprep.subr.mxu0 0.0
        %534 = vmatpush1.msra.mxu0 0.0
        %535 = vmatprep.subr.mxu0 0.0
        %536 = vmatpush1.msra.mxu0 0.0
        %537 = vmatprep.subr.mxu0 0.0
        %538 = vmatpush1.msra.mxu0 0.0
        %539 = vmatprep.subr.mxu0 0.0
        %540 = vmatpush1.msra.mxu0 0.0
        %541 = vmatprep.subr.mxu0 0.0
        %542 = vmatpush1.msra.mxu0 0.0
        %543 = vmatprep.subr.mxu0 0.0
        %544 = vmatpush1.msra.mxu0 0.0
        %545 = vmatprep.subr.mxu0 0.0
        %546 = vmatpush1.msra.mxu0 0.0
        %547 = vmatprep.mubr.f32.mxu0 0.0
        %548 = vmatmul.mubr.f32.gmra.mrb[0].mxu0 %v481
        %v549 = vpop.f32.mrb[0].mxu0
        %v550 = vadd.f32 0.0, %v549
        %v551 = vpop.f32.mrb[0].mxu0
        %552 = vdwg.mxu0
        %553 = vst.msk [vmem:[#allocation2] sm:$0xff] %vm383, %v550
        %554 = vrot.lane.b32.xlu0 %v377, 120
        %v555 = vpop.permute.xlu0 %554
        %556 = vrot.lane.b32.xlu0 %v378, 120
        %v557 = vpop.permute.xlu0 %556
        %v558 = vsel %vm383, %v555, 0
        %v560 = vsel %vm383, %v557, 0
        %562 = vmatprep.subr.mxu0 0.0
        %563 = vmatpush1.xpose.msra.mxu0 %v560
        %564 = vmatprep.subr.mxu0 0.0
        %565 = vmatpush1.xpose.msra.mxu0 0.0
        %566 = vmatprep.subr.mxu0 0.0
        %567 = vmatpush1.xpose.msra.mxu0 0.0
        %568 = vmatprep.subr.mxu0 0.0
        %569 = vmatpush1.xpose.msra.mxu0 0.0
        %570 = vmatprep.subr.mxu0 0.0
        %571 = vmatpush1.xpose.msra.mxu0 0.0
        %572 = vmatprep.subr.mxu0 0.0
        %573 = vmatpush1.xpose.msra.mxu0 0.0
        %574 = vmatprep.subr.mxu0 0.0
        %575 = vmatpush1.xpose.msra.mxu0 0.0
        %576 = vmatprep.subr.mxu0 0.0
        %577 = vmatpush1.xpose.msra.mxu0 0.0
        %578 = vmatprep.subr.mxu0 0.0
        %579 = vmatpush1.xpose.msra.mxu0 0.0
        %580 = vmatprep.subr.mxu0 0.0
        %581 = vmatpush1.xpose.msra.mxu0 0.0
        %582 = vmatprep.subr.mxu0 0.0
        %583 = vmatpush1.xpose.msra.mxu0 0.0
        %584 = vmatprep.subr.mxu0 0.0
        %585 = vmatpush1.xpose.msra.mxu0 0.0
        %586 = vmatprep.subr.mxu0 0.0
        %587 = vmatpush1.xpose.msra.mxu0 0.0
        %588 = vmatprep.subr.mxu0 0.0
        %589 = vmatpush1.xpose.msra.mxu0 0.0
        %590 = vmatprep.subr.mxu0 0.0
        %591 = vmatpush1.xpose.msra.mxu0 0.0
        %592 = vmatprep.subr.mxu0 0.0
        %593 = vmatpush1.xpose.msra.mxu0 0.0
        %594 = vmatprep.subr.mxu0 0.0
        %595 = vmatpush1.xpose.msra.mxu0 0.0
        %596 = vmatprep.subr.mxu0 0.0
        %597 = vmatpush1.xpose.msra.mxu0 0.0
        %598 = vmatprep.subr.mxu0 0.0
        %599 = vmatpush1.xpose.msra.mxu0 0.0
        %600 = vmatprep.subr.mxu0 0.0
        %601 = vmatpush1.xpose.msra.mxu0 0.0
        %602 = vmatprep.subr.mxu0 0.0
        %603 = vmatpush1.xpose.msra.mxu0 0.0
        %604 = vmatprep.subr.mxu0 0.0
        %605 = vmatpush1.xpose.msra.mxu0 0.0
        %606 = vmatprep.subr.mxu0 0.0
        %607 = vmatpush1.xpose.msra.mxu0 0.0
        %608 = vmatprep.subr.mxu0 0.0
        %609 = vmatpush1.xpose.msra.mxu0 0.0
        %610 = vmatprep.subr.mxu0 0.0
        %611 = vmatpush1.xpose.msra.mxu0 0.0
        %612 = vmatprep.subr.mxu0 0.0
        %613 = vmatpush1.xpose.msra.mxu0 0.0
        %614 = vmatprep.subr.mxu0 0.0
        %615 = vmatpush1.xpose.msra.mxu0 0.0
        %616 = vmatprep.subr.mxu0 0.0
        %617 = vmatpush1.xpose.msra.mxu0 0.0
        %618 = vmatprep.subr.mxu0 0.0
        %619 = vmatpush1.xpose.msra.mxu0 0.0
        %620 = vmatprep.subr.mxu0 0.0
        %621 = vmatpush1.xpose.msra.mxu0 0.0
        %622 = vmatprep.subr.mxu0 0.0
        %623 = vmatpush1.xpose.msra.mxu0 0.0
        %624 = vmatprep.subr.mxu0 0.0
        %625 = vmatpush1.xpose.msra.mxu0 0.0
        %626 = vmatprep.mubr.f32.mxu0 0.0
        %627 = vmatmul.mubr.f32.gmra.mrb[0].mxu0 %v558
        %v628 = vpop.f32.mrb[0].mxu0
        %v629 = vadd.f32 0.0, %v628
        %v630 = vpop.f32.mrb[0].mxu0
        %631 = vdwg.mxu0
        %v632 = vmul.f32 %v629, 0.35355338
        %v633 = vadd.f32 %v632, %v465
        %v634 = vsel %vm383, %v633, -inf
        %635 = vmax.xlane.f32.xlu0 %v634
        %v636 = vpop.xlane.xlu0 %635
        %v637 = vsub.f32 %v633, %v636
        %v638 = vmul.f32 %v637, 1.442695
        %v639 = vpow.pop %v638
        %v640 = vsel %vm383, %v639, 0.0
        %641 = vadd.xlane.f32.xlu0 %v640
        %v642 = vpop.xlane.xlu0 %641
        %v643 = vrcp.pop %v642
        %v644 = vmul.f32 %v639, %v643
        %s645 = scalar_lea.vmem %s353, 8 [#allocation3]
        %646 = vst.msk [vmem:[%s645] sm:$0xff] %vm383, %v644
        %648 = vrot.lane.b32.xlu0 %v379, 120
        %v649 = vpop.permute.xlu0 %648
        %v652 = vsel %vm383, %v644, 0
        %654 = vmatprep.subr.mxu0 0.0
        %655 = vmatpush1.msra.mxu0 %v649
        %656 = vmatprep.subr.mxu0 0.0
        %657 = vmatpush1.msra.mxu0 0.0
        %658 = vmatprep.subr.mxu0 0.0
        %659 = vmatpush1.msra.mxu0 0.0
        %660 = vmatprep.subr.mxu0 0.0
        %661 = vmatpush1.msra.mxu0 0.0
        %662 = vmatprep.subr.mxu0 0.0
        %663 = vmatpush1.msra.mxu0 0.0
        %664 = vmatprep.subr.mxu0 0.0
        %665 = vmatpush1.msra.mxu0 0.0
        %666 = vmatprep.subr.mxu0 0.0
        %667 = vmatpush1.msra.mxu0 0.0
        %668 = vmatprep.subr.mxu0 0.0
        %669 = vmatpush1.msra.mxu0 0.0
        %670 = vmatprep.subr.mxu0 0.0
        %671 = vmatpush1.msra.mxu0 0.0
        %672 = vmatprep.subr.mxu0 0.0
        %673 = vmatpush1.msra.mxu0 0.0
        %674 = vmatprep.subr.mxu0 0.0
        %675 = vmatpush1.msra.mxu0 0.0
        %676 = vmatprep.subr.mxu0 0.0
        %677 = vmatpush1.msra.mxu0 0.0
        %678 = vmatprep.subr.mxu0 0.0
        %679 = vmatpush1.msra.mxu0 0.0
        %680 = vmatprep.subr.mxu0 0.0
        %681 = vmatpush1.msra.mxu0 0.0
        %682 = vmatprep.subr.mxu0 0.0
        %683 = vmatpush1.msra.mxu0 0.0
        %684 = vmatprep.subr.mxu0 0.0
        %685 = vmatpush1.msra.mxu0 0.0
        %686 = vmatprep.subr.mxu0 0.0
        %687 = vmatpush1.msra.mxu0 0.0
        %688 = vmatprep.subr.mxu0 0.0
        %689 = vmatpush1.msra.mxu0 0.0
        %690 = vmatprep.subr.mxu0 0.0
        %691 = vmatpush1.msra.mxu0 0.0
        %692 = vmatprep.subr.mxu0 0.0
        %693 = vmatpush1.msra.mxu0 0.0
        %694 = vmatprep.subr.mxu0 0.0
        %695 = vmatpush1.msra.mxu0 0.0
        %696 = vmatprep.subr.mxu0 0.0
        %697 = vmatpush1.msra.mxu0 0.0
        %698 = vmatprep.subr.mxu0 0.0
        %699 = vmatpush1.msra.mxu0 0.0
        %700 = vmatprep.subr.mxu0 0.0
        %701 = vmatpush1.msra.mxu0 0.0
        %702 = vmatprep.subr.mxu0 0.0
        %703 = vmatpush1.msra.mxu0 0.0
        %704 = vmatprep.subr.mxu0 0.0
        %705 = vmatpush1.msra.mxu0 0.0
        %706 = vmatprep.subr.mxu0 0.0
        %707 = vmatpush1.msra.mxu0 0.0
        %708 = vmatprep.subr.mxu0 0.0
        %709 = vmatpush1.msra.mxu0 0.0
        %710 = vmatprep.subr.mxu0 0.0
        %711 = vmatpush1.msra.mxu0 0.0
        %712 = vmatprep.subr.mxu0 0.0
        %713 = vmatpush1.msra.mxu0 0.0
        %714 = vmatprep.subr.mxu0 0.0
        %715 = vmatpush1.msra.mxu0 0.0
        %716 = vmatprep.subr.mxu0 0.0
        %717 = vmatpush1.msra.mxu0 0.0
        %718 = vmatprep.mubr.f32.mxu0 0.0
        %719 = vmatmul.mubr.f32.gmra.mrb[0].mxu0 %v652
        %v720 = vpop.f32.mrb[0].mxu0
        %v721 = vadd.f32 0.0, %v720
        %v722 = vpop.f32.mrb[0].mxu0
        %723 = vdwg.mxu0
        %725 = vrot.lane.b32.xlu0 %v721, 8
        %v726 = vpop.permute.xlu0 %725
        %vm728 = vcmask 130112
        %729 = vst.msk [vmem:[#allocation2] sm:$0xff] %vm728, %v726
        %730 = vrot.lane.b32.xlu0 %v377, 112
        %v731 = vpop.permute.xlu0 %730
        %732 = vrot.lane.b32.xlu0 %v378, 112
        %v733 = vpop.permute.xlu0 %732
        %v734 = vsel %vm383, %v731, 0
        %v736 = vsel %vm383, %v733, 0
        %738 = vmatprep.subr.mxu0 0.0
        %739 = vmatpush1.xpose.msra.mxu0 %v736
        %740 = vmatprep.subr.mxu0 0.0
        %741 = vmatpush1.xpose.msra.mxu0 0.0
        %742 = vmatprep.subr.mxu0 0.0
        %743 = vmatpush1.xpose.msra.mxu0 0.0
        %744 = vmatprep.subr.mxu0 0.0
        %745 = vmatpush1.xpose.msra.mxu0 0.0
        %746 = vmatprep.subr.mxu0 0.0
        %747 = vmatpush1.xpose.msra.mxu0 0.0
        %748 = vmatprep.subr.mxu0 0.0
        %749 = vmatpush1.xpose.msra.mxu0 0.0
        %750 = vmatprep.subr.mxu0 0.0
        %751 = vmatpush1.xpose.msra.mxu0 0.0
        %752 = vmatprep.subr.mxu0 0.0
        %753 = vmatpush1.xpose.msra.mxu0 0.0
        %754 = vmatprep.subr.mxu0 0.0
        %755 = vmatpush1.xpose.msra.mxu0 0.0
        %756 = vmatprep.subr.mxu0 0.0
        %757 = vmatpush1.xpose.msra.mxu0 0.0
        %758 = vmatprep.subr.mxu0 0.0
        %759 = vmatpush1.xpose.msra.mxu0 0.0
        %760 = vmatprep.subr.mxu0 0.0
        %761 = vmatpush1.xpose.msra.mxu0 0.0
        %762 = vmatprep.subr.mxu0 0.0
        %763 = vmatpush1.xpose.msra.mxu0 0.0
        %764 = vmatprep.subr.mxu0 0.0
        %765 = vmatpush1.xpose.msra.mxu0 0.0
        %766 = vmatprep.subr.mxu0 0.0
        %767 = vmatpush1.xpose.msra.mxu0 0.0
        %768 = vmatprep.subr.mxu0 0.0
        %769 = vmatpush1.xpose.msra.mxu0 0.0
        %770 = vmatprep.subr.mxu0 0.0
        %771 = vmatpush1.xpose.msra.mxu0 0.0
        %772 = vmatprep.subr.mxu0 0.0
        %773 = vmatpush1.xpose.msra.mxu0 0.0
        %774 = vmatprep.subr.mxu0 0.0
        %775 = vmatpush1.xpose.msra.mxu0 0.0
        %776 = vmatprep.subr.mxu0 0.0
        %777 = vmatpush1.xpose.msra.mxu0 0.0
        %778 = vmatprep.subr.mxu0 0.0
        %779 = vmatpush1.xpose.msra.mxu0 0.0
        %780 = vmatprep.subr.mxu0 0.0
        %781 = vmatpush1.xpose.msra.mxu0 0.0
        %782 = vmatprep.subr.mxu0 0.0
        %783 = vmatpush1.xpose.msra.mxu0 0.0
        %784 = vmatprep.subr.mxu0 0.0
        %785 = vmatpush1.xpose.msra.mxu0 0.0
        %786 = vmatprep.subr.mxu0 0.0
        %787 = vmatpush1.xpose.msra.mxu0 0.0
        %788 = vmatprep.subr.mxu0 0.0
        %789 = vmatpush1.xpose.msra.mxu0 0.0
        %790 = vmatprep.subr.mxu0 0.0
        %791 = vmatpush1.xpose.msra.mxu0 0.0
        %792 = vmatprep.subr.mxu0 0.0
        %793 = vmatpush1.xpose.msra.mxu0 0.0
        %794 = vmatprep.subr.mxu0 0.0
        %795 = vmatpush1.xpose.msra.mxu0 0.0
        %796 = vmatprep.subr.mxu0 0.0
        %797 = vmatpush1.xpose.msra.mxu0 0.0
        %798 = vmatprep.subr.mxu0 0.0
        %799 = vmatpush1.xpose.msra.mxu0 0.0
        %800 = vmatprep.subr.mxu0 0.0
        %801 = vmatpush1.xpose.msra.mxu0 0.0
        %802 = vmatprep.mubr.f32.mxu0 0.0
        %803 = vmatmul.mubr.f32.gmra.mrb[0].mxu0 %v734
        %v804 = vpop.f32.mrb[0].mxu0
        %v805 = vadd.f32 0.0, %v804
        %v806 = vpop.f32.mrb[0].mxu0
        %807 = vdwg.mxu0
        %v808 = vmul.f32 %v805, 0.35355338
        %v809 = vadd.f32 %v808, %v465
        %v810 = vsel %vm383, %v809, -inf
        %811 = vmax.xlane.f32.xlu0 %v810
        %v812 = vpop.xlane.xlu0 %811
        %v813 = vsub.f32 %v809, %v812
        %v814 = vmul.f32 %v813, 1.442695
        %v815 = vpow.pop %v814
        %v816 = vsel %vm383, %v815, 0.0
        %817 = vadd.xlane.f32.xlu0 %v816
        %v818 = vpop.xlane.xlu0 %817
        %v819 = vrcp.pop %v818
        %v820 = vmul.f32 %v815, %v819
        %s821 = scalar_lea.vmem %s353, 16 [#allocation3]
        %822 = vst.msk [vmem:[%s821] sm:$0xff] %vm383, %v820
        %823 = vrot.lane.b32.xlu0 %v379, 112
        %v824 = vpop.permute.xlu0 %823
        %v827 = vsel %vm383, %v820, 0
        %829 = vmatprep.subr.mxu0 0.0
        %830 = vmatpush1.msra.mxu0 %v824
        %831 = vmatprep.subr.mxu0 0.0
        %832 = vmatpush1.msra.mxu0 0.0
        %833 = vmatprep.subr.mxu0 0.0
        %834 = vmatpush1.msra.mxu0 0.0
        %835 = vmatprep.subr.mxu0 0.0
        %836 = vmatpush1.msra.mxu0 0.0
        %837 = vmatprep.subr.mxu0 0.0
        %838 = vmatpush1.msra.mxu0 0.0
        %839 = vmatprep.subr.mxu0 0.0
        %840 = vmatpush1.msra.mxu0 0.0
        %841 = vmatprep.subr.mxu0 0.0
        %842 = vmatpush1.msra.mxu0 0.0
        %843 = vmatprep.subr.mxu0 0.0
        %844 = vmatpush1.msra.mxu0 0.0
        %845 = vmatprep.subr.mxu0 0.0
        %846 = vmatpush1.msra.mxu0 0.0
        %847 = vmatprep.subr.mxu0 0.0
        %848 = vmatpush1.msra.mxu0 0.0
        %849 = vmatprep.subr.mxu0 0.0
        %850 = vmatpush1.msra.mxu0 0.0
        %851 = vmatprep.subr.mxu0 0.0
        %852 = vmatpush1.msra.mxu0 0.0
        %853 = vmatprep.subr.mxu0 0.0
        %854 = vmatpush1.msra.mxu0 0.0
        %855 = vmatprep.subr.mxu0 0.0
        %856 = vmatpush1.msra.mxu0 0.0
        %857 = vmatprep.subr.mxu0 0.0
        %858 = vmatpush1.msra.mxu0 0.0
        %859 = vmatprep.subr.mxu0 0.0
        %860 = vmatpush1.msra.mxu0 0.0
        %861 = vmatprep.subr.mxu0 0.0
        %862 = vmatpush1.msra.mxu0 0.0
        %863 = vmatprep.subr.mxu0 0.0
        %864 = vmatpush1.msra.mxu0 0.0
        %865 = vmatprep.subr.mxu0 0.0
        %866 = vmatpush1.msra.mxu0 0.0
        %867 = vmatprep.subr.mxu0 0.0
        %868 = vmatpush1.msra.mxu0 0.0
        %869 = vmatprep.subr.mxu0 0.0
        %870 = vmatpush1.msra.mxu0 0.0
        %871 = vmatprep.subr.mxu0 0.0
        %872 = vmatpush1.msra.mxu0 0.0
        %873 = vmatprep.subr.mxu0 0.0
        %874 = vmatpush1.msra.mxu0 0.0
        %875 = vmatprep.subr.mxu0 0.0
        %876 = vmatpush1.msra.mxu0 0.0
        %877 = vmatprep.subr.mxu0 0.0
        %878 = vmatpush1.msra.mxu0 0.0
        %879 = vmatprep.subr.mxu0 0.0
        %880 = vmatpush1.msra.mxu0 0.0
        %881 = vmatprep.subr.mxu0 0.0
        %882 = vmatpush1.msra.mxu0 0.0
        %883 = vmatprep.subr.mxu0 0.0
        %884 = vmatpush1.msra.mxu0 0.0
        %885 = vmatprep.subr.mxu0 0.0
        %886 = vmatpush1.msra.mxu0 0.0
        %887 = vmatprep.subr.mxu0 0.0
        %888 = vmatpush1.msra.mxu0 0.0
        %889 = vmatprep.subr.mxu0 0.0
        %890 = vmatpush1.msra.mxu0 0.0
        %891 = vmatprep.subr.mxu0 0.0
        %892 = vmatpush1.msra.mxu0 0.0
        %893 = vmatprep.mubr.f32.mxu0 0.0
        %894 = vmatmul.mubr.f32.gmra.mrb[0].mxu0 %v827
        %v895 = vpop.f32.mrb[0].mxu0
        %v896 = vadd.f32 0.0, %v895
        %v897 = vpop.f32.mrb[0].mxu0
        %898 = vdwg.mxu0
        %900 = vrot.lane.b32.xlu0 %v896, 16
        %v901 = vpop.permute.xlu0 %900
        %vm903 = vcmask 195712
        %904 = vst.msk [vmem:[#allocation2] sm:$0xff] %vm903, %v901
        %905 = vrot.lane.b32.xlu0 %v377, 104
        %v906 = vpop.permute.xlu0 %905
        %907 = vrot.lane.b32.xlu0 %v378, 104
        %v908 = vpop.permute.xlu0 %907
        %v909 = vsel %vm383, %v906, 0
        %v911 = vsel %vm383, %v908, 0
        %913 = vmatprep.subr.mxu0 0.0
        %914 = vmatpush1.xpose.msra.mxu0 %v911
        %915 = vmatprep.subr.mxu0 0.0
        %916 = vmatpush1.xpose.msra.mxu0 0.0
        %917 = vmatprep.subr.mxu0 0.0
        %918 = vmatpush1.xpose.msra.mxu0 0.0
        %919 = vmatprep.subr.mxu0 0.0
        %920 = vmatpush1.xpose.msra.mxu0 0.0
        %921 = vmatprep.subr.mxu0 0.0
        %922 = vmatpush1.xpose.msra.mxu0 0.0
        %923 = vmatprep.subr.mxu0 0.0
        %924 = vmatpush1.xpose.msra.mxu0 0.0
        %925 = vmatprep.subr.mxu0 0.0
        %926 = vmatpush1.xpose.msra.mxu0 0.0
        %927 = vmatprep.subr.mxu0 0.0
        %928 = vmatpush1.xpose.msra.mxu0 0.0
        %929 = vmatprep.subr.mxu0 0.0
        %930 = vmatpush1.xpose.msra.mxu0 0.0
        %931 = vmatprep.subr.mxu0 0.0
        %932 = vmatpush1.xpose.msra.mxu0 0.0
        %933 = vmatprep.subr.mxu0 0.0
        %934 = vmatpush1.xpose.msra.mxu0 0.0
        %935 = vmatprep.subr.mxu0 0.0
        %936 = vmatpush1.xpose.msra.mxu0 0.0
        %937 = vmatprep.subr.mxu0 0.0
        %938 = vmatpush1.xpose.msra.mxu0 0.0
        %939 = vmatprep.subr.mxu0 0.0
        %940 = vmatpush1.xpose.msra.mxu0 0.0
        %941 = vmatprep.subr.mxu0 0.0
        %942 = vmatpush1.xpose.msra.mxu0 0.0
        %943 = vmatprep.subr.mxu0 0.0
        %944 = vmatpush1.xpose.msra.mxu0 0.0
        %945 = vmatprep.subr.mxu0 0.0
        %946 = vmatpush1.xpose.msra.mxu0 0.0
        %947 = vmatprep.subr.mxu0 0.0
        %948 = vmatpush1.xpose.msra.mxu0 0.0
        %949 = vmatprep.subr.mxu0 0.0
        %950 = vmatpush1.xpose.msra.mxu0 0.0
        %951 = vmatprep.subr.mxu0 0.0
        %952 = vmatpush1.xpose.msra.mxu0 0.0
        %953 = vmatprep.subr.mxu0 0.0
        %954 = vmatpush1.xpose.msra.mxu0 0.0
        %955 = vmatprep.subr.mxu0 0.0
        %956 = vmatpush1.xpose.msra.mxu0 0.0
        %957 = vmatprep.subr.mxu0 0.0
        %958 = vmatpush1.xpose.msra.mxu0 0.0
        %959 = vmatprep.subr.mxu0 0.0
        %960 = vmatpush1.xpose.msra.mxu0 0.0
        %961 = vmatprep.subr.mxu0 0.0
        %962 = vmatpush1.xpose.msra.mxu0 0.0
        %963 = vmatprep.subr.mxu0 0.0
        %964 = vmatpush1.xpose.msra.mxu0 0.0
        %965 = vmatprep.subr.mxu0 0.0
        %966 = vmatpush1.xpose.msra.mxu0 0.0
        %967 = vmatprep.subr.mxu0 0.0
        %968 = vmatpush1.xpose.msra.mxu0 0.0
        %969 = vmatprep.subr.mxu0 0.0
        %970 = vmatpush1.xpose.msra.mxu0 0.0
        %971 = vmatprep.subr.mxu0 0.0
        %972 = vmatpush1.xpose.msra.mxu0 0.0
        %973 = vmatprep.subr.mxu0 0.0
        %974 = vmatpush1.xpose.msra.mxu0 0.0
        %975 = vmatprep.subr.mxu0 0.0
        %976 = vmatpush1.xpose.msra.mxu0 0.0
        %977 = vmatprep.mubr.f32.mxu0 0.0
        %978 = vmatmul.mubr.f32.gmra.mrb[0].mxu0 %v909
        %v979 = vpop.f32.mrb[0].mxu0
        %v980 = vadd.f32 0.0, %v979
        %v981 = vpop.f32.mrb[0].mxu0
        %982 = vdwg.mxu0
        %v983 = vmul.f32 %v980, 0.35355338
        %v984 = vadd.f32 %v983, %v465
        %v985 = vsel %vm383, %v984, -inf
        %986 = vmax.xlane.f32.xlu0 %v985
        %v987 = vpop.xlane.xlu0 %986
        %v988 = vsub.f32 %v984, %v987
        %v989 = vmul.f32 %v988, 1.442695
        %v990 = vpow.pop %v989
        %v991 = vsel %vm383, %v990, 0.0
        %992 = vadd.xlane.f32.xlu0 %v991
        %v993 = vpop.xlane.xlu0 %992
        %v994 = vrcp.pop %v993
        %v995 = vmul.f32 %v990, %v994
        %s996 = scalar_lea.vmem %s353, 24 [#allocation3]
        %997 = vst.msk [vmem:[%s996] sm:$0xff] %vm383, %v995
        %998 = vrot.lane.b32.xlu0 %v379, 104
        %v999 = vpop.permute.xlu0 %998
        %v1002 = vsel %vm383, %v995, 0
        %1004 = vmatprep.subr.mxu0 0.0
        %1005 = vmatpush1.msra.mxu0 %v999
        %1006 = vmatprep.subr.mxu0 0.0
        %1007 = vmatpush1.msra.mxu0 0.0
        %1008 = vmatprep.subr.mxu0 0.0
        %1009 = vmatpush1.msra.mxu0 0.0
        %1010 = vmatprep.subr.mxu0 0.0
        %1011 = vmatpush1.msra.mxu0 0.0
        %1012 = vmatprep.subr.mxu0 0.0
        %1013 = vmatpush1.msra.mxu0 0.0
        %1014 = vmatprep.subr.mxu0 0.0
        %1015 = vmatpush1.msra.mxu0 0.0
        %1016 = vmatprep.subr.mxu0 0.0
        %1017 = vmatpush1.msra.mxu0 0.0
        %1018 = vmatprep.subr.mxu0 0.0
        %1019 = vmatpush1.msra.mxu0 0.0
        %1020 = vmatprep.subr.mxu0 0.0
        %1021 = vmatpush1.msra.mxu0 0.0
        %1022 = vmatprep.subr.mxu0 0.0
        %1023 = vmatpush1.msra.mxu0 0.0
        %1024 = vmatprep.subr.mxu0 0.0
        %1025 = vmatpush1.msra.mxu0 0.0
        %1026 = vmatprep.subr.mxu0 0.0
        %1027 = vmatpush1.msra.mxu0 0.0
        %1028 = vmatprep.subr.mxu0 0.0
        %1029 = vmatpush1.msra.mxu0 0.0
        %1030 = vmatprep.subr.mxu0 0.0
        %1031 = vmatpush1.msra.mxu0 0.0
        %1032 = vmatprep.subr.mxu0 0.0
        %1033 = vmatpush1.msra.mxu0 0.0
        %1034 = vmatprep.subr.mxu0 0.0
        %1035 = vmatpush1.msra.mxu0 0.0
        %1036 = vmatprep.subr.mxu0 0.0
        %1037 = vmatpush1.msra.mxu0 0.0
        %1038 = vmatprep.subr.mxu0 0.0
        %1039 = vmatpush1.msra.mxu0 0.0
        %1040 = vmatprep.subr.mxu0 0.0
        %1041 = vmatpush1.msra.mxu0 0.0
        %1042 = vmatprep.subr.mxu0 0.0
        %1043 = vmatpush1.msra.mxu0 0.0
        %1044 = vmatprep.subr.mxu0 0.0
        %1045 = vmatpush1.msra.mxu0 0.0
        %1046 = vmatprep.subr.mxu0 0.0
        %1047 = vmatpush1.msra.mxu0 0.0
        %1048 = vmatprep.subr.mxu0 0.0
        %1049 = vmatpush1.msra.mxu0 0.0
        %1050 = vmatprep.subr.mxu0 0.0
        %1051 = vmatpush1.msra.mxu0 0.0
        %1052 = vmatprep.subr.mxu0 0.0
        %1053 = vmatpush1.msra.mxu0 0.0
        %1054 = vmatprep.subr.mxu0 0.0
        %1055 = vmatpush1.msra.mxu0 0.0
        %1056 = vmatprep.subr.mxu0 0.0
        %1057 = vmatpush1.msra.mxu0 0.0
        %1058 = vmatprep.subr.mxu0 0.0
        %1059 = vmatpush1.msra.mxu0 0.0
        %1060 = vmatprep.subr.mxu0 0.0
        %1061 = vmatpush1.msra.mxu0 0.0
        %1062 = vmatprep.subr.mxu0 0.0
        %1063 = vmatpush1.msra.mxu0 0.0
        %1064 = vmatprep.subr.mxu0 0.0
        %1065 = vmatpush1.msra.mxu0 0.0
        %1066 = vmatprep.subr.mxu0 0.0
        %1067 = vmatpush1.msra.mxu0 0.0
        %1068 = vmatprep.mubr.f32.mxu0 0.0
        %1069 = vmatmul.mubr.f32.gmra.mrb[0].mxu0 %v1002
        %v1070 = vpop.f32.mrb[0].mxu0
        %v1071 = vadd.f32 0.0, %v1070
        %v1072 = vpop.f32.mrb[0].mxu0
        %1073 = vdwg.mxu0
        %1075 = vrot.lane.b32.xlu0 %v1071, 24
        %v1076 = vpop.permute.xlu0 %1075
        %vm1078 = vcmask 261312
        %1079 = vst.msk [vmem:[#allocation2] sm:$0xff] %vm1078, %v1076
        %v1080 = vld [vmem:[#allocation2] sm:$0xff]
        %v1081 = vld [vmem:[%s5] sm:$0xff]
        %v1082 = vld [vmem:[%s5 + $0x8] sm:$0xff]
        %v1083 = vld [vmem:[%s5 + $0x10] sm:$0xff]
        %v1084 = vld [vmem:[%s5 + $0x18] sm:$0xff]
        %vm1085 = vcmask 261120
        %v1087 = vsel %vm1085, %v1080, 0
        %1089 = vmatprep.subr.mxu0 0.0
        %1090 = vmatpush1.msra.mxu0 %v1081
        %1091 = vmatprep.subr.mxu0 0.0
        %1092 = vmatpush1.msra.mxu0 %v1082
        %1093 = vmatprep.subr.mxu0 0.0
        %1094 = vmatpush1.msra.mxu0 %v1083
        %1095 = vmatprep.subr.mxu0 0.0
        %1096 = vmatpush1.msra.mxu0 %v1084
        %1097 = vmatprep.subr.mxu0 0.0
        %1098 = vmatpush1.msra.mxu0 0.0
        %1099 = vmatprep.subr.mxu0 0.0
        %1100 = vmatpush1.msra.mxu0 0.0
        %1101 = vmatprep.subr.mxu0 0.0
        %1102 = vmatpush1.msra.mxu0 0.0
        %1103 = vmatprep.subr.mxu0 0.0
        %1104 = vmatpush1.msra.mxu0 0.0
        %1105 = vmatprep.subr.mxu0 0.0
        %1106 = vmatpush1.msra.mxu0 0.0
        %1107 = vmatprep.subr.mxu0 0.0
        %1108 = vmatpush1.msra.mxu0 0.0
        %1109 = vmatprep.subr.mxu0 0.0
        %1110 = vmatpush1.msra.mxu0 0.0
        %1111 = vmatprep.subr.mxu0 0.0
        %1112 = vmatpush1.msra.mxu0 0.0
        %1113 = vmatprep.subr.mxu0 0.0
        %1114 = vmatpush1.msra.mxu0 0.0
        %1115 = vmatprep.subr.mxu0 0.0
        %1116 = vmatpush1.msra.mxu0 0.0
        %1117 = vmatprep.subr.mxu0 0.0
        %1118 = vmatpush1.msra.mxu0 0.0
        %1119 = vmatprep.subr.mxu0 0.0
        %1120 = vmatpush1.msra.mxu0 0.0
        %1121 = vmatprep.subr.mxu0 0.0
        %1122 = vmatpush1.msra.mxu0 0.0
        %1123 = vmatprep.subr.mxu0 0.0
        %1124 = vmatpush1.msra.mxu0 0.0
        %1125 = vmatprep.subr.mxu0 0.0
        %1126 = vmatpush1.msra.mxu0 0.0
        %1127 = vmatprep.subr.mxu0 0.0
        %1128 = vmatpush1.msra.mxu0 0.0
        %1129 = vmatprep.subr.mxu0 0.0
        %1130 = vmatpush1.msra.mxu0 0.0
        %1131 = vmatprep.subr.mxu0 0.0
        %1132 = vmatpush1.msra.mxu0 0.0
        %1133 = vmatprep.subr.mxu0 0.0
        %1134 = vmatpush1.msra.mxu0 0.0
        %1135 = vmatprep.subr.mxu0 0.0
        %1136 = vmatpush1.msra.mxu0 0.0
        %1137 = vmatprep.subr.mxu0 0.0
        %1138 = vmatpush1.msra.mxu0 0.0
        %1139 = vmatprep.subr.mxu0 0.0
        %1140 = vmatpush1.msra.mxu0 0.0
        %1141 = vmatprep.subr.mxu0 0.0
        %1142 = vmatpush1.msra.mxu0 0.0
        %1143 = vmatprep.subr.mxu0 0.0
        %1144 = vmatpush1.msra.mxu0 0.0
        %1145 = vmatprep.subr.mxu0 0.0
        %1146 = vmatpush1.msra.mxu0 0.0
        %1147 = vmatprep.subr.mxu0 0.0
        %1148 = vmatpush1.msra.mxu0 0.0
        %1149 = vmatprep.subr.mxu0 0.0
        %1150 = vmatpush1.msra.mxu0 0.0
        %1151 = vmatprep.subr.mxu0 0.0
        %1152 = vmatpush1.msra.mxu0 0.0
        %1153 = vmatprep.mubr.f32.mxu0 0.0
        %1154 = vmatmul.mubr.f32.gmra.mrb[0].mxu0 %v1087
        %v1155 = vpop.f32.mrb[0].mxu0
        %v1156 = vadd.f32 0.0, %v1155
        %v1157 = vpop.f32.mrb[0].mxu0
        %1158 = vdwg.mxu0
        %v1159 = vld [vmem:[%s372] sm:$0xff]
        %v1160 = vadd.f32 %v1159, %v1156
        %v1161 = vld [vmem:[%s6] sm:$0x1]
        %v1163 = vlaneseq
        %v1164 = vshrl.u32 %v1163, 7
        %v1165 = vsub.s32 0, %v1164
        %v1166 = vrot.slane %v1161, %v1165
        %v1168 = vadd.f32 %v1160, %v1166
        %1169 = vst.msk [vmem:[%s376] sm:$0xff] %vm1085, %v1168
        %p1170 = scmp.lt.s32.totalorder %s23, 1
        %s1171 = scalar_select %p1170, %s23, 1
        %s1172 = smul.addr %s1171, 8
        %s1173 = scalar_lea.vmem %s7, %s1172
        %s1174 = sand.u32 %s229, 1
        %s1175 = scalar_lea.sflag [#allocation4], %s1174
        %s1176 = sand.u32 %s229, 1
        %s1177 = smul.addr %s1176, 32
        %s1178 = scalar_lea.vmem [#allocation3], %s1177
        // Predicated region
        $region49: #{encoder_layer_forward.5} parent=47 // pred_check
          %p1179 = pneg %p213
        $region50: #{encoder_layer_forward.5} parent=47 // pred_check_branch
          %1181 = sbr.rel (%p1179) target = $region52
        $region51: #{encoder_layer_forward.5} parent=47 // pred_region
          _
        $region52: #{encoder_layer_forward.5} parent=47 // pred_fallthru
          _
        // Predicated region
        $region53: #{encoder_layer_forward.5} parent=47 // pred_check
          %p1182 = pneg %p239
        $region54: #{encoder_layer_forward.5} parent=47 // pred_check_branch
          %1184 = sbr.rel (%p1182) target = $region56
        $region55: #{encoder_layer_forward.5} parent=47 // pred_region
          %s1186 = ssub.s32 512, 512
          %1187 = vsyncadd %s1175, %s1186
          %s1188 = smul.addr %s23, 4
          %s1189 = smul.addr %s1188, 128
          %s1190 = scalar_lea.hbm %s8, %s1189
          %s1191 = sshll.u32 %s1178, 4
          %s1192 = int_to_ptr.vmem [resolvable:$true] %s1191
          %1197 = dma.vmem_to_hbm [thread:$0]  %s1192, 512, %s1190, %s1175, 128, 128, 8
        $region56: #{encoder_layer_forward.5} parent=47 // pred_fallthru
          _
      $region48: #{encoder_layer_forward.5} parent=5 // pred_fallthru
        _
      %p1198 = scmp.le.s32.totalorder 2, %s18
      // Predicated region
      $region57: #{encoder_layer_forward.5} parent=5 // pred_check
        %p1199 = pneg %p1198
      $region58: #{encoder_layer_forward.5} parent=5 // pred_check_branch
        %1201 = sbr.rel (%p1199) target = $region60
      $region59: #{encoder_layer_forward.5} parent=5 // pred_region
        %s1202 = ssub.s32 %s18, 2
        // Predicated region
        $region61: #{encoder_layer_forward.5} parent=59 // pred_check
          %p1203 = pneg %p219
        $region62: #{encoder_layer_forward.5} parent=59 // pred_check_branch
          %1205 = sbr.rel (%p1203) target = $region64
        $region63: #{encoder_layer_forward.5} parent=59 // pred_region
          %p1206 = scmp.lt.s32.totalorder %s24, 1
          %s1207 = scalar_select %p1206, %s24, 1
          %s1208 = smul.addr %s1207, 8
          %s1209 = scalar_lea.vmem %s7, %s1208
        $region64: #{encoder_layer_forward.5} parent=59 // pred_fallthru
          _
        // Predicated region
        $region65: #{encoder_layer_forward.5} parent=59 // pred_check
          %p1210 = pneg %p245
        $region66: #{encoder_layer_forward.5} parent=59 // pred_check_branch
          %1212 = sbr.rel (%p1210) target = $region68
        $region67: #{encoder_layer_forward.5} parent=59 // pred_region
          %s1213 = sand.u32 %s230, 1
          %s1214 = scalar_lea.sflag [#allocation4], %s1213
          %s1215 = sand.u32 %s230, 1
          %s1216 = smul.addr %s1215, 32
          %s1217 = scalar_lea.vmem [#allocation3], %s1216
          %1218 = dma.done %s1214, 512
        $region68: #{encoder_layer_forward.5} parent=59 // pred_fallthru
          _
      $region60: #{encoder_layer_forward.5} parent=5 // pred_fallthru
        _
    $region6: #{encoder_layer_forward.5} parent=1 // loop_footer
      %s22 = sadd.s32 1, %s18
    $region7: #{encoder_layer_forward.5} parent=1 // loop_footer_branch
      %17 = sbr.rel target = $region3
    $region8: #{encoder_layer_forward.5} parent=1 // loop_exit
      _
    %1219 = vsyncpa [#allocation4], 1
    %s1220 = scalar_lea.sflag [#allocation4], 1
    %1221 = vsyncpa %s1220, 1

</llo_original>
